<compile_context>
chip_gen: v6e
topology: v6e:2x2x1
jax: 0.10.0
libtpu: 0.0.40
codegen_flags: <defaults>
</compile_context>

<pallas_src>
import functools

import numpy as np
import jax
import jax.numpy as jnp
from jax.experimental import pallas as pl
from jax.experimental.pallas import tpu as pltpu  # noqa: F401  (TPU backend namespace)


# --------------------------------------------------------------------------
# Fused Pallas kernel
# --------------------------------------------------------------------------

def _sac_fused_kernel(obs_ref, w1t_ref, w2t_ref, mats_ref, vecs_ref,
                      head_ref, latent_ref, conv_ref,
                      *, conv1_n, conv2_n, latent_dim, hidden, a2):
    f32 = jnp.float32
    bf16 = jnp.bfloat16

    # ---- conv1: dense (Toeplitz-unrolled) matmul, batch-major ----
    x = obs_ref[...].astype(bf16)                                     # [B, C*H*W]
    h1 = jnp.dot(x, w1t_ref[...], preferred_element_type=f32)
    h1 = jnp.maximum(h1 + vecs_ref[0:1, 0:conv1_n], 0.0)              # [B, C1*H1*W1]

    # ---- conv2: one dot; output lanes ordered (c2,h,w) == PyTorch flatten ----
    cflat = jnp.dot(h1.astype(bf16), w2t_ref[...], preferred_element_type=f32)
    cflat = jnp.maximum(cflat + vecs_ref[1:2, 0:conv2_n], 0.0)        # [B, C2*H2*W2]
    conv_ref[...] = cflat                                             # single lane-dense store

    # ---- fc1 + LayerNorm(eps=1e-5, affine) + tanh ----
    y = jnp.dot(cflat.astype(bf16), mats_ref[0:conv2_n, 0:latent_dim],
                preferred_element_type=f32) + vecs_ref[2:3, 0:latent_dim]
    mean = jnp.mean(y, axis=-1, keepdims=True)
    var = jnp.mean((y - mean) ** 2, axis=-1, keepdims=True)
    latent = jnp.tanh((y - mean) * jax.lax.rsqrt(var + 1e-5)
                      * vecs_ref[3:4, 0:latent_dim] + vecs_ref[4:5, 0:latent_dim])
    latent_ref[...] = latent

    # ---- MLP head; mu and log_std emitted as one merged [B, 2*a_dim] output ----
    # TODO(synk): prev_action / prev_reward are ignored, matching rlpyt's pixel
    # SAC actor; revisit before fusing a variant that concatenates them.
    r1 = conv2_n
    h = jnp.maximum(
        jnp.dot(latent.astype(bf16), mats_ref[r1:r1 + latent_dim, 0:hidden],
                preferred_element_type=f32) + vecs_ref[5:6, 0:hidden], 0.0)
    r2 = r1 + latent_dim
    h = jnp.maximum(
        jnp.dot(h.astype(bf16), mats_ref[r2:r2 + hidden, 0:hidden],
                preferred_element_type=f32) + vecs_ref[6:7, 0:hidden], 0.0)
    r3 = r2 + hidden
    head_ref[...] = (jnp.dot(h.astype(bf16), mats_ref[r3:r3 + hidden, 0:a2],
                             preferred_element_type=f32) + vecs_ref[7:8, 0:a2])


# --------------------------------------------------------------------------
# Wrapper
# --------------------------------------------------------------------------

def sac_model_forward(kparams, observation, prev_action, prev_reward, *, dims):
    """Mirrors SacModel.forward: returns (mu, log_std, latent, conv[NCHW])."""
    latent_dim, hidden, a_dim = dims
    B, C, H, W = observation.shape
    H1 = (H - 3) // 2 + 1
    H2 = H1 - 2
    W1 = (W - 3) // 2 + 1
    W2 = W1 - 2

    w1t, w2t, mats, vecs = (kparams["w1t"], kparams["w2t"],
                            kparams["mats"], kparams["vecs"])
    conv1_n = w1t.shape[1]
    conv2_n = w2t.shape[1]
    C2 = conv2_n // (H2 * W2)
    a2 = 2 * a_dim

    obs_flat = observation.reshape(B, C * H * W)     # contiguous NCHW flatten, no copy

    kern = functools.partial(_sac_fused_kernel, conv1_n=conv1_n, conv2_n=conv2_n,
                             latent_dim=latent_dim, hidden=hidden, a2=a2)
    head, latent, conv_flat = pl.pallas_call(
        kern,
        out_shape=(
            jax.ShapeDtypeStruct((B, a2), jnp.float32),         # [mu | log_std]
            jax.ShapeDtypeStruct((B, latent_dim), jnp.float32),
            jax.ShapeDtypeStruct((B, conv2_n), jnp.float32),    # conv, (c,h,w) lanes
        ),
    )(obs_flat, w1t, w2t, mats, vecs)

    mu, log_std = head[:, :a_dim], head[:, a_dim:]
    conv = conv_flat.reshape(B, C2, H2, W2)          # free reshape; no transpose needed
    return mu, log_std, latent, conv


# --------------------------------------------------------------------------
# Parameters: PyTorch-layout init + one-time host-side re-layout for the kernel
# --------------------------------------------------------------------------

def init_params(key, in_c=4, c1=8, c2=8, img_hw=16, latent=32, hidden=32, action_dim=6):
    ks = jax.random.split(key, 12)
    s = 0.05
    w_conv1 = s * jax.random.normal(ks[0], (c1, in_c, 3, 3), jnp.float32)
    b_conv1 = s * jax.random.normal(ks[1], (c1,), jnp.float32)
    w_conv2 = s * jax.random.normal(ks[2], (c2, c1, 3, 3), jnp.float32)
    b_conv2 = s * jax.random.normal(ks[3], (c2,), jnp.float32)
    h1 = (img_hw - 3) // 2 + 1
    h2 = h1 - 2
    conv_flat = c2 * h2 * h2
    w_fc1 = s * jax.random.normal(ks[4], (conv_flat, latent), jnp.float32)
    b_fc1 = s * jax.random.normal(ks[5], (1, latent), jnp.float32)
    ln_g = jnp.ones((1, latent), jnp.float32)
    ln_b = jnp.zeros((1, latent), jnp.float32)
    w_m1 = s * jax.random.normal(ks[6], (latent, hidden), jnp.float32)
    b_m1 = s * jax.random.normal(ks[7], (1, hidden), jnp.float32)
    w_m2 = s * jax.random.normal(ks[8], (hidden, hidden), jnp.float32)
    b_m2 = s * jax.random.normal(ks[9], (1, hidden), jnp.float32)
    # NOTE: final head takes the MLP hidden, so its fan-in is `hidden` (was
    # `latent` before -- only worked because hidden == latent).
    w_m3 = s * jax.random.normal(ks[10], (hidden, 2 * action_dim), jnp.float32)
    b_m3 = s * jax.random.normal(ks[11], (1, 2 * action_dim), jnp.float32)
    return dict(
        w_conv1=w_conv1, b_conv1=b_conv1, w_conv2=w_conv2, b_conv2=b_conv2,
        w_fc1=w_fc1, b_fc1=b_fc1, ln_g=ln_g, ln_b=ln_b,
        w_m1=w_m1, b_m1=b_m1, w_m2=w_m2, b_m2=b_m2, w_m3=w_m3, b_m3=b_m3,
    )


def _conv_toeplitz(w_oihw, in_h, in_w, stride):
    """Unroll a VALID conv into a dense [Cin*H*W, Cout*Ho*Wo] matrix.
    Row order matches an NCHW flatten of the input; column order matches an
    NCHW flatten of the output (so downstream Linear weights apply unchanged)."""
    w = np.asarray(w_oihw, np.float32)
    cout, cin, kh, kw = w.shape
    ho = (in_h - kh) // stride + 1
    wo = (in_w - kw) // stride + 1
    t = np.zeros((cin, in_h, in_w, cout, ho, wo), np.float32)
    wt = np.transpose(w, (1, 2, 3, 0))                    # [Cin, KH, KW, Cout]
    for i in range(ho):
        for j in range(wo):
            t[:, stride * i:stride * i + kh, stride * j:stride * j + kw, :, i, j] = wt
    return t.reshape(cin * in_h * in_w, cout * ho * wo)


def prepare_kernel_params(p, img_hw):
    """One-time, host-side (outside jit): Toeplitz-unroll the convs, cast all
    MXU weights to bf16, and pack operands into a few slabs (fewer DMAs)."""
    c1 = p["w_conv1"].shape[0]
    c2 = p["w_conv2"].shape[0]
    latent = p["w_fc1"].shape[1]
    hidden = p["w_m1"].shape[1]
    a2 = p["w_m3"].shape[1]
    h1 = (img_hw - 3) // 2 + 1
    h2 = h1 - 2
    conv1_n = c1 * h1 * h1
    conv2_n = c2 * h2 * h2
    assert conv2_n % 8 == 0 and latent % 8 == 0 and hidden % 8 == 0  # aligned slab offsets

    w1t = _conv_toeplitz(p["w_conv1"], img_hw, img_hw, stride=2)     # [C*H*W, conv1_n]
    w2t = _conv_toeplitz(p["w_conv2"], h1, h1, stride=1)             # [conv1_n, conv2_n]

    # Small matmul weights packed row-wise into one bf16 slab.
    mats = np.zeros((conv2_n + latent + 2 * hidden, max(latent, hidden, a2)), np.float32)
    mats[0:conv2_n, 0:latent] = np.asarray(p["w_fc1"])
    r = conv2_n
    mats[r:r + latent, 0:hidden] = np.asarray(p["w_m1"]); r += latent
    mats[r:r + hidden, 0:hidden] = np.asarray(p["w_m2"]); r += hidden
    mats[r:r + hidden, 0:a2] = np.asarray(p["w_m3"])

    # All biases / LayerNorm params packed into one f32 slab (one row each).
    width = max(conv1_n, conv2_n, latent, hidden, a2)
    vecs = np.zeros((8, width), np.float32)
    vecs[0, 0:conv1_n] = np.repeat(np.asarray(p["b_conv1"]), h1 * h1)
    vecs[1, 0:conv2_n] = np.repeat(np.asarray(p["b_conv2"]), h2 * h2)
    vecs[2, 0:latent] = np.asarray(p["b_fc1"]).reshape(-1)
    vecs[3, 0:latent] = np.asarray(p["ln_g"]).reshape(-1)
    vecs[4, 0:latent] = np.asarray(p["ln_b"]).reshape(-1)
    vecs[5, 0:hidden] = np.asarray(p["b_m1"]).reshape(-1)
    vecs[6, 0:hidden] = np.asarray(p["b_m2"]).reshape(-1)
    vecs[7, 0:a2] = np.asarray(p["b_m3"]).reshape(-1)

    kparams = dict(
        w1t=jnp.asarray(w1t, jnp.bfloat16),
        w2t=jnp.asarray(w2t, jnp.bfloat16),
        mats=jnp.asarray(mats, jnp.bfloat16),
        vecs=jnp.asarray(vecs, jnp.float32),
    )
    dims = (latent, hidden, a2 // 2)       # static ints, baked into the jitted wrapper
    return kparams, dims


# --------------------------------------------------------------------------
# Pure-JAX (XLA) reference, PyTorch-layout params.  mxu_dtype=bf16 reproduces
# the kernel's operand rounding so a tight tolerance still catches layout bugs.
# --------------------------------------------------------------------------

def reference_forward(params, observation, mxu_dtype=jnp.float32):
    f32 = jnp.float32
    c = lambda a: a.astype(mxu_dtype)
    x = jax.lax.conv_general_dilated(
        c(observation), c(params["w_conv1"]), window_strides=(2, 2), padding="VALID",
        dimension_numbers=("NCHW", "OIHW", "NCHW"), preferred_element_type=f32)
    x = jnp.maximum(x + params["b_conv1"][None, :, None, None], 0.0)
    conv = jax.lax.conv_general_dilated(
        c(x), c(params["w_conv2"]), window_strides=(1, 1), padding="VALID",
        dimension_numbers=("NCHW", "OIHW", "NCHW"), preferred_element_type=f32)
    conv = jnp.maximum(conv + params["b_conv2"][None, :, None, None], 0.0)
    B = conv.shape[0]
    flat = conv.reshape(B, -1)
    y = jnp.dot(c(flat), c(params["w_fc1"]), preferred_element_type=f32) + params["b_fc1"]
    mean = y.mean(-1, keepdims=True)
    var = ((y - mean) ** 2).mean(-1, keepdims=True)
    latent = jnp.tanh((y - mean) * jax.lax.rsqrt(var + 1e-5)
                      * params["ln_g"] + params["ln_b"])
    h = jnp.maximum(jnp.dot(c(latent), c(params["w_m1"]), preferred_element_type=f32)
                    + params["b_m1"], 0.0)
    h = jnp.maximum(jnp.dot(c(h), c(params["w_m2"]), preferred_element_type=f32)
                    + params["b_m2"], 0.0)
    out = jnp.dot(c(h), c(params["w_m3"]), preferred_element_type=f32) + params["b_m3"]
    mu, log_std = jnp.split(out, 2, -1)
    return mu, log_std, latent, conv


# --------------------------------------------------------------------------

if __name__ == "__main__":
    key = jax.random.PRNGKey(0)
    k_obs, k_act, k_rew, k_par = jax.random.split(key, 4)

    B, C, H, W = 2, 4, 16, 16
    action_dim = 6

    observation = jax.random.normal(k_obs, (B, C, H, W), jnp.float32)   # NCHW
    prev_action = jax.random.normal(k_act, (B, action_dim), jnp.float32)
    prev_reward = jax.random.normal(k_rew, (B,), jnp.float32)

    params = init_params(k_par, in_c=C, img_hw=H, action_dim=action_dim)
    kparams, dims = prepare_kernel_params(params, img_hw=H)   # one-time, host-side

    fwd = jax.jit(functools.partial(sac_model_forward, dims=dims))
    mu, log_std, latent, conv = fwd(kparams, observation, prev_action, prev_reward)
    jax.block_until_ready((mu, log_std, latent, conv))

    assert mu.shape == (B, action_dim)
    assert log_std.shape == (B, action_dim)
    assert latent.shape == (B, 32)
    assert conv.shape == (B, 8, 5, 5)

    # (a) Tight check vs a reference that feeds the same bf16 operands to the
    #     MXU -> differences are accumulation-order only; catches layout bugs.
    ref_bf16 = jax.jit(functools.partial(reference_forward, mxu_dtype=jnp.bfloat16))(
        params, observation)
    for got, ref in zip((mu, log_std, latent, conv), ref_bf16):
        assert bool(jnp.allclose(got, ref, atol=5e-3, rtol=1e-2)), "bf16-matched mismatch"

    # (b) Loose check vs the pure-f32 reference -> bounds total bf16 drift.
    ref_f32 = jax.jit(reference_forward)(params, observation)
    for got, ref in zip((mu, log_std, latent, conv), ref_f32):
        assert bool(jnp.allclose(got, ref, atol=5e-2, rtol=5e-2)), "f32 drift too large"

    print("KERNEL_OK")
</pallas_src>

<mosaic_0001>
module attributes {stable_mosaic.version = 11 : i64} {
  func.func @_sac_fused_kernel(%arg0: memref<2x1024xf32, #tpu.memory_space<vmem>>, %arg1: memref<1024x392xbf16, #tpu.memory_space<vmem>>, %arg2: memref<392x200xbf16, #tpu.memory_space<vmem>>, %arg3: memref<296x32xbf16, #tpu.memory_space<vmem>>, %arg4: memref<8x392xf32, #tpu.memory_space<vmem>>, %arg5: memref<2x12xf32, #tpu.memory_space<vmem>>, %arg6: memref<2x32xf32, #tpu.memory_space<vmem>>, %arg7: memref<2x200xf32, #tpu.memory_space<vmem>>) attributes {dimension_semantics = [], scalar_prefetch = 0 : i64, scratch_operands = 0 : i64, tpu.core_type = #tpu.core_type<tc>} {
    %c0 = arith.constant 0 : index
    %c0_0 = arith.constant 0 : index
    %0 = vector.load %arg0[%c0, %c0_0] : memref<2x1024xf32, #tpu.memory_space<vmem>>, vector<2x1024xf32>
    %1 = arith.truncf %0 : vector<2x1024xf32> to vector<2x1024xbf16>
    %c0_1 = arith.constant 0 : index
    %c0_2 = arith.constant 0 : index
    %2 = vector.load %arg1[%c0_1, %c0_2] : memref<1024x392xbf16, #tpu.memory_space<vmem>>, vector<1024x392xbf16>
    %cst = arith.constant dense<0.000000e+00> : vector<2x392xf32>
    %3 = tpu.matmul %1, %2, %cst {dimension_numbers = #tpu.dot_dimension_numbers<[1], [0], [0], [1], [0, 0, 1, 1], [], []>} : vector<2x1024xbf16>, vector<1024x392xbf16>, vector<2x392xf32> -> vector<2x392xf32>
    %c0_3 = arith.constant 0 : index
    %c0_4 = arith.constant 0 : index
    %4 = vector.load %arg4[%c0_3, %c0_4] : memref<8x392xf32, #tpu.memory_space<vmem>>, vector<1x392xf32>
    %5 = vector.broadcast %4 : vector<1x392xf32> to vector<2x392xf32>
    %6 = arith.addf %3, %5 : vector<2x392xf32>
    %cst_5 = arith.constant 0.000000e+00 : f32
    %7 = vector.broadcast %cst_5 : f32 to vector<2x392xf32>
    %8 = arith.maximumf %6, %7 : vector<2x392xf32>
    %9 = arith.truncf %8 : vector<2x392xf32> to vector<2x392xbf16>
    %c0_6 = arith.constant 0 : index
    %c0_7 = arith.constant 0 : index
    %10 = vector.load %arg2[%c0_6, %c0_7] : memref<392x200xbf16, #tpu.memory_space<vmem>>, vector<392x200xbf16>
    %cst_8 = arith.constant dense<0.000000e+00> : vector<2x200xf32>
    %11 = tpu.matmul %9, %10, %cst_8 {dimension_numbers = #tpu.dot_dimension_numbers<[1], [0], [0], [1], [0, 0, 1, 1], [], []>} : vector<2x392xbf16>, vector<392x200xbf16>, vector<2x200xf32> -> vector<2x200xf32>
    %c1 = arith.constant 1 : index
    %c0_9 = arith.constant 0 : index
    %12 = vector.load %arg4[%c1, %c0_9] : memref<8x392xf32, #tpu.memory_space<vmem>>, vector<1x200xf32>
    %13 = vector.broadcast %12 : vector<1x200xf32> to vector<2x200xf32>
    %14 = arith.addf %11, %13 : vector<2x200xf32>
    %cst_10 = arith.constant 0.000000e+00 : f32
    %15 = vector.broadcast %cst_10 : f32 to vector<2x200xf32>
    %16 = arith.maximumf %14, %15 : vector<2x200xf32>
    %c0_11 = arith.constant 0 : index
    %c0_12 = arith.constant 0 : index
    %17 = vector.load %arg7[%c0_11, %c0_12] : memref<2x200xf32, #tpu.memory_space<vmem>>, vector<2x200xf32>
    tpu.vector_store %arg7[%c0_11, %c0_12], %16 {strides = array<i32>} : memref<2x200xf32, #tpu.memory_space<vmem>>, vector<2x200xf32>,
    %18 = arith.truncf %16 : vector<2x200xf32> to vector<2x200xbf16>
    %c0_13 = arith.constant 0 : index
    %c0_14 = arith.constant 0 : index
    %19 = vector.load %arg3[%c0_13, %c0_14] : memref<296x32xbf16, #tpu.memory_space<vmem>>, vector<200x32xbf16>
    %cst_15 = arith.constant dense<0.000000e+00> : vector<2x32xf32>
    %20 = tpu.matmul %18, %19, %cst_15 {dimension_numbers = #tpu.dot_dimension_numbers<[1], [0], [0], [1], [0, 0, 1, 1], [], []>} : vector<2x200xbf16>, vector<200x32xbf16>, vector<2x32xf32> -> vector<2x32xf32>
    %c2 = arith.constant 2 : index
    %c0_16 = arith.constant 0 : index
    %21 = vector.load %arg4[%c2, %c0_16] : memref<8x392xf32, #tpu.memory_space<vmem>>, vector<1x32xf32>
    %22 = vector.broadcast %21 : vector<1x32xf32> to vector<2x32xf32>
    %23 = arith.addf %20, %22 : vector<2x32xf32>
    %cst_17 = arith.constant dense<0.000000e+00> : vector<2xf32>
    %24 = vector.multi_reduction <add>, %23, %cst_17 [1] : vector<2x32xf32> to vector<2xf32>
    %25 = vector.shape_cast %24 : vector<2xf32> to vector<2x1xf32>
    %cst_18 = arith.constant 3.200000e+01 : f32
    %26 = vector.broadcast %cst_18 : f32 to vector<2x1xf32>
    %27 = arith.divf %25, %26 : vector<2x1xf32>
    %28 = vector.broadcast %27 : vector<2x1xf32> to vector<2x32xf32>
    %29 = arith.subf %23, %28 : vector<2x32xf32>
    %30 = arith.mulf %29, %29 : vector<2x32xf32>
    %cst_19 = arith.constant dense<0.000000e+00> : vector<2xf32>
    %31 = vector.multi_reduction <add>, %30, %cst_19 [1] : vector<2x32xf32> to vector<2xf32>
    %32 = vector.shape_cast %31 : vector<2xf32> to vector<2x1xf32>
    %cst_20 = arith.constant 3.200000e+01 : f32
    %33 = vector.broadcast %cst_20 : f32 to vector<2x1xf32>
    %34 = arith.divf %32, %33 : vector<2x1xf32>
    %35 = vector.broadcast %27 : vector<2x1xf32> to vector<2x32xf32>
    %36 = arith.subf %23, %35 : vector<2x32xf32>
    %cst_21 = arith.constant 9.99999974E-6 : f32
    %37 = vector.broadcast %cst_21 : f32 to vector<2x1xf32>
    %38 = arith.addf %34, %37 : vector<2x1xf32>
    %39 = math.rsqrt %38 : vector<2x1xf32>
    %40 = vector.broadcast %39 : vector<2x1xf32> to vector<2x32xf32>
    %41 = arith.mulf %36, %40 : vector<2x32xf32>
    %c3 = arith.constant 3 : index
    %c0_22 = arith.constant 0 : index
    %42 = vector.load %arg4[%c3, %c0_22] : memref<8x392xf32, #tpu.memory_space<vmem>>, vector<1x32xf32>
    %43 = vector.broadcast %42 : vector<1x32xf32> to vector<2x32xf32>
    %44 = arith.mulf %41, %43 : vector<2x32xf32>
    %c4 = arith.constant 4 : index
    %c0_23 = arith.constant 0 : index
    %45 = vector.load %arg4[%c4, %c0_23] : memref<8x392xf32, #tpu.memory_space<vmem>>, vector<1x32xf32>
    %46 = vector.broadcast %45 : vector<1x32xf32> to vector<2x32xf32>
    %47 = arith.addf %44, %46 : vector<2x32xf32>
    %48 = math.tanh %47 : vector<2x32xf32>
    %c0_24 = arith.constant 0 : index
    %c0_25 = arith.constant 0 : index
    %49 = vector.load %arg6[%c0_24, %c0_25] : memref<2x32xf32, #tpu.memory_space<vmem>>, vector<2x32xf32>
    tpu.vector_store %arg6[%c0_24, %c0_25], %48 {strides = array<i32>} : memref<2x32xf32, #tpu.memory_space<vmem>>, vector<2x32xf32>,
    %50 = arith.truncf %48 : vector<2x32xf32> to vector<2x32xbf16>
    %c200 = arith.constant 200 : index
    %c0_26 = arith.constant 0 : index
    %51 = vector.load %arg3[%c200, %c0_26] : memref<296x32xbf16, #tpu.memory_space<vmem>>, vector<32x32xbf16>
    %cst_27 = arith.constant dense<0.000000e+00> : vector<2x32xf32>
    %52 = tpu.matmul %50, %51, %cst_27 {dimension_numbers = #tpu.dot_dimension_numbers<[1], [0], [0], [1], [0, 0, 1, 1], [], []>} : vector<2x32xbf16>, vector<32x32xbf16>, vector<2x32xf32> -> vector<2x32xf32>
    %c5 = arith.constant 5 : index
    %c0_28 = arith.constant 0 : index
    %53 = vector.load %arg4[%c5, %c0_28] : memref<8x392xf32, #tpu.memory_space<vmem>>, vector<1x32xf32>
    %54 = vector.broadcast %53 : vector<1x32xf32> to vector<2x32xf32>
    %55 = arith.addf %52, %54 : vector<2x32xf32>
    %cst_29 = arith.constant 0.000000e+00 : f32
    %56 = vector.broadcast %cst_29 : f32 to vector<2x32xf32>
    %57 = arith.maximumf %55, %56 : vector<2x32xf32>
    %58 = arith.truncf %57 : vector<2x32xf32> to vector<2x32xbf16>
    %c232 = arith.constant 232 : index
    %c0_30 = arith.constant 0 : index
    %59 = vector.load %arg3[%c232, %c0_30] : memref<296x32xbf16, #tpu.memory_space<vmem>>, vector<32x32xbf16>
    %cst_31 = arith.constant dense<0.000000e+00> : vector<2x32xf32>
    %60 = tpu.matmul %58, %59, %cst_31 {dimension_numbers = #tpu.dot_dimension_numbers<[1], [0], [0], [1], [0, 0, 1, 1], [], []>} : vector<2x32xbf16>, vector<32x32xbf16>, vector<2x32xf32> -> vector<2x32xf32>
    %c6 = arith.constant 6 : index
    %c0_32 = arith.constant 0 : index
    %61 = vector.load %arg4[%c6, %c0_32] : memref<8x392xf32, #tpu.memory_space<vmem>>, vector<1x32xf32>
    %62 = vector.broadcast %61 : vector<1x32xf32> to vector<2x32xf32>
    %63 = arith.addf %60, %62 : vector<2x32xf32>
    %cst_33 = arith.constant 0.000000e+00 : f32
    %64 = vector.broadcast %cst_33 : f32 to vector<2x32xf32>
    %65 = arith.maximumf %63, %64 : vector<2x32xf32>
    %66 = arith.truncf %65 : vector<2x32xf32> to vector<2x32xbf16>
    %c264 = arith.constant 264 : index
    %c0_34 = arith.constant 0 : index
    %67 = vector.load %arg3[%c264, %c0_34] : memref<296x32xbf16, #tpu.memory_space<vmem>>, vector<32x12xbf16>
    %cst_35 = arith.constant dense<0.000000e+00> : vector<2x12xf32>
    %68 = tpu.matmul %66, %67, %cst_35 {dimension_numbers = #tpu.dot_dimension_numbers<[1], [0], [0], [1], [0, 0, 1, 1], [], []>} : vector<2x32xbf16>, vector<32x12xbf16>, vector<2x12xf32> -> vector<2x12xf32>
    %c7 = arith.constant 7 : index
    %c0_36 = arith.constant 0 : index
    %69 = vector.load %arg4[%c7, %c0_36] : memref<8x392xf32, #tpu.memory_space<vmem>>, vector<1x12xf32>
    %70 = vector.broadcast %69 : vector<1x12xf32> to vector<2x12xf32>
    %71 = arith.addf %68, %70 : vector<2x12xf32>
    %c0_37 = arith.constant 0 : index
    %c0_38 = arith.constant 0 : index
    %72 = vector.load %arg5[%c0_37, %c0_38] : memref<2x12xf32, #tpu.memory_space<vmem>>, vector<2x12xf32>
    tpu.vector_store %arg5[%c0_37, %c0_38], %71 {strides = array<i32>} : memref<2x12xf32, #tpu.memory_space<vmem>>, vector<2x12xf32>,
    return
  }
}

</mosaic_0001>

<llo_original>
// kernel: sac_model_forward.1
$region0: #{sac_model_forward.1}
  #allocation0 [shape = 'u32[]', space=smem, size = 0x4, offset = 0x4, fixed_abs, tag = 'smem constant byte address 0x4 - core index']
  #allocation1 [shape = 'u32[144,128]{1,0:T(1,128)}', space=vmem, size = 0x12000, scoped, tag = 'internal scratch']
  %s0 = inlined_call_operand.vmem [shape: f32[2,1024], index: 0, kind: input, shape index: {}]
  %s1 = inlined_call_operand.vmem [shape: bf16[1024,392], index: 1, kind: input, shape index: {}]
  %s2 = inlined_call_operand.vmem [shape: bf16[392,200], index: 2, kind: input, shape index: {}]
  %s3 = inlined_call_operand.vmem [shape: bf16[296,32], index: 3, kind: input, shape index: {}]
  %s4 = inlined_call_operand.vmem [shape: f32[8,392], index: 4, kind: input, shape index: {}]
  %s5 = inlined_call_operand.vmem [shape: f32[2,12], index: 5, kind: output, shape index: {0}]
  %s6 = inlined_call_operand.hbm [shape: f32[2,32], index: 6, kind: output, shape index: {1}]
  %s7 = inlined_call_operand.vmem [shape: f32[2,200], index: 7, kind: output, shape index: {2}]
  %8 = xla_tuple %s5, %s6, %s7
  %s9 = sld [smem:[#allocation0]]
  $region46: #{sac_model_forward.1} parent=0
    _
  %s11 = ssub.s32 1, %s9
  %s12 = scalar_select 0, %s11, %s9
  $region1: #{sac_model_forward.1} parent=0
    #allocation2 [shape = 'u8[1024]{0}', space=vmem, size = 0x400, scoped, tag = 'output window, operand 1, single buffered']
    #allocation3 [shape = 's32[1]{0}', space=sflag, size = 0x4, scoped, tag = 'scoped memory for sac_model_forward.1']
    %13 = vsyncpa [#allocation3], 0
    // Predicated region
    $region2: #{sac_model_forward.1} parent=1 // pred_check
      _
    $region3: #{sac_model_forward.1} parent=1 // pred_check_branch
      %15 = sbr.rel (0) target = $region5
    $region4: #{sac_model_forward.1} parent=1 // pred_region
      _
    $region5: #{sac_model_forward.1} parent=1 // pred_fallthru
      _
    // Predicated region
    $region6: #{sac_model_forward.1} parent=1 // pred_check
      _
    $region7: #{sac_model_forward.1} parent=1 // pred_check_branch
      %17 = sbr.rel (0) target = $region9
    $region8: #{sac_model_forward.1} parent=1 // pred_region
      _
    $region9: #{sac_model_forward.1} parent=1 // pred_fallthru
      _
    // Predicated region
    $region10: #{sac_model_forward.1} parent=1 // pred_check
      _
    $region11: #{sac_model_forward.1} parent=1 // pred_check_branch
      %19 = sbr.rel (0) target = $region13
    $region12: #{sac_model_forward.1} parent=1 // pred_region
      _
    $region13: #{sac_model_forward.1} parent=1 // pred_fallthru
      _
    // Predicated region
    $region14: #{sac_model_forward.1} parent=1 // pred_check
      _
    $region15: #{sac_model_forward.1} parent=1 // pred_check_branch
      %21 = sbr.rel (0) target = $region17
    $region16: #{sac_model_forward.1} parent=1 // pred_region
      _
    $region17: #{sac_model_forward.1} parent=1 // pred_fallthru
      _
    // Predicated region
    $region18: #{sac_model_forward.1} parent=1 // pred_check
      _
    $region19: #{sac_model_forward.1} parent=1 // pred_check_branch
      %23 = sbr.rel (0) target = $region21
    $region20: #{sac_model_forward.1} parent=1 // pred_region
      _
    $region21: #{sac_model_forward.1} parent=1 // pred_fallthru
      _
    %v25 = vld [vmem:[%s0] sm:$0xff]
    %v26 = vld [vmem:[%s0 + $0x8] sm:$0xff]
    %v29 = vcombine.high %v25, %v25
    %v31 = vunpack.c.l.s4 1983009808
    %v32 = vunpack.c.0.s8 %v31
    %v33 = vlaneseq
    %v34 = vshrl.u32 %v33, 7
    %v35 = vsub.s32 %v32, %v34
    %v36 = vrot.slane %v25, %v35
    %v38 = vunpack.c.l.s4 1983009808
    %v39 = vunpack.c.0.s8 %v38
    %v40 = vlaneseq
    %v41 = vshrl.u32 %v40, 7
    %v42 = vsub.s32 %v39, %v41
    %v43 = vrot.slane %v29, %v42
    %v44 = vcombine.high %v36, %v36
    %v45 = vcombine.high %v43, %v43
    %v46 = vcombine.high %v26, %v26
    %v48 = vunpack.c.l.s4 1983009808
    %v49 = vunpack.c.0.s8 %v48
    %v50 = vlaneseq
    %v51 = vshrl.u32 %v50, 7
    %v52 = vsub.s32 %v49, %v51
    %v53 = vrot.slane %v26, %v52
    %v55 = vunpack.c.l.s4 1983009808
    %v56 = vunpack.c.0.s8 %v55
    %v57 = vlaneseq
    %v58 = vshrl.u32 %v57, 7
    %v59 = vsub.s32 %v56, %v58
    %v60 = vrot.slane %v46, %v59
    %v61 = vcombine.high %v53, %v53
    %v62 = vcombine.high %v60, %v60
    %v71 = vpack.c.bf16 %v36, %v36
    %v72 = vpack.c.bf16 %v44, %v44
    %v73 = vpack.c.bf16 %v43, %v43
    %v74 = vpack.c.bf16 %v45, %v45
    %v75 = vpack.c.bf16 %v53, %v53
    %v76 = vpack.c.bf16 %v61, %v61
    %v77 = vpack.c.bf16 %v60, %v60
    %v78 = vpack.c.bf16 %v62, %v62
    %v79 = vld [vmem:[%s1] sm:$0xff]
    %v80 = vld [vmem:[%s1 + $0x8] sm:$0xff]
    %v81 = vld [vmem:[%s1 + $0x10] sm:$0xff]
    %v82 = vld [vmem:[%s1 + $0x18] sm:$0xff]
    %v83 = vld [vmem:[%s1 + $0x20] sm:$0xff]
    %v84 = vld [vmem:[%s1 + $0x28] sm:$0xff]
    %v85 = vld [vmem:[%s1 + $0x30] sm:$0xff]
    %v86 = vld [vmem:[%s1 + $0x38] sm:$0xff]
    %v87 = vld [vmem:[%s1 + $0x40] sm:$0xff]
    %v88 = vld [vmem:[%s1 + $0x48] sm:$0xff]
    %v89 = vld [vmem:[%s1 + $0x50] sm:$0xff]
    %v90 = vld [vmem:[%s1 + $0x58] sm:$0xff]
    %v91 = vld [vmem:[%s1 + $0x60] sm:$0xff]
    %v92 = vld [vmem:[%s1 + $0x68] sm:$0xff]
    %v93 = vld [vmem:[%s1 + $0x70] sm:$0xff]
    %v94 = vld [vmem:[%s1 + $0x78] sm:$0xff]
    %v95 = vld [vmem:[%s1 + $0x80] sm:$0xff]
    %v96 = vld [vmem:[%s1 + $0x88] sm:$0xff]
    %v97 = vld [vmem:[%s1 + $0x90] sm:$0xff]
    %v98 = vld [vmem:[%s1 + $0x98] sm:$0xff]
    %v99 = vld [vmem:[%s1 + $0xa0] sm:$0xff]
    %v100 = vld [vmem:[%s1 + $0xa8] sm:$0xff]
    %v101 = vld [vmem:[%s1 + $0xb0] sm:$0xff]
    %v102 = vld [vmem:[%s1 + $0xb8] sm:$0xff]
    %v103 = vld [vmem:[%s1 + $0xc0] sm:$0xff]
    %v104 = vld [vmem:[%s1 + $0xc8] sm:$0xff]
    %v105 = vld [vmem:[%s1 + $0xd0] sm:$0xff]
    %v106 = vld [vmem:[%s1 + $0xd8] sm:$0xff]
    %v107 = vld [vmem:[%s1 + $0xe0] sm:$0xff]
    %v108 = vld [vmem:[%s1 + $0xe8] sm:$0xff]
    %v109 = vld [vmem:[%s1 + $0xf0] sm:$0xff]
    %v110 = vld [vmem:[%s1 + $0xf8] sm:$0xff]
    %v111 = vld [vmem:[%s1 + $0x100] sm:$0xff]
    %v112 = vld [vmem:[%s1 + $0x108] sm:$0xff]
    %v113 = vld [vmem:[%s1 + $0x110] sm:$0xff]
    %v114 = vld [vmem:[%s1 + $0x118] sm:$0xff]
    %v115 = vld [vmem:[%s1 + $0x120] sm:$0xff]
    %v116 = vld [vmem:[%s1 + $0x128] sm:$0xff]
    %v117 = vld [vmem:[%s1 + $0x130] sm:$0xff]
    %v118 = vld [vmem:[%s1 + $0x138] sm:$0xff]
    %v119 = vld [vmem:[%s1 + $0x140] sm:$0xff]
    %v120 = vld [vmem:[%s1 + $0x148] sm:$0xff]
    %v121 = vld [vmem:[%s1 + $0x150] sm:$0xff]
    %v122 = vld [vmem:[%s1 + $0x158] sm:$0xff]
    %v123 = vld [vmem:[%s1 + $0x160] sm:$0xff]
    %v124 = vld [vmem:[%s1 + $0x168] sm:$0xff]
    %v125 = vld [vmem:[%s1 + $0x170] sm:$0xff]
    %v126 = vld [vmem:[%s1 + $0x178] sm:$0xff]
    %v127 = vld [vmem:[%s1 + $0x180] sm:$0xff]
    %v128 = vld [vmem:[%s1 + $0x188] sm:$0xff]
    %v129 = vld [vmem:[%s1 + $0x190] sm:$0xff]
    %v130 = vld [vmem:[%s1 + $0x198] sm:$0xff]
    %v131 = vld [vmem:[%s1 + $0x1a0] sm:$0xff]
    %v132 = vld [vmem:[%s1 + $0x1a8] sm:$0xff]
    %v133 = vld [vmem:[%s1 + $0x1b0] sm:$0xff]
    %v134 = vld [vmem:[%s1 + $0x1b8] sm:$0xff]
    %v135 = vld [vmem:[%s1 + $0x1c0] sm:$0xff]
    %v136 = vld [vmem:[%s1 + $0x1c8] sm:$0xff]
    %v137 = vld [vmem:[%s1 + $0x1d0] sm:$0xff]
    %v138 = vld [vmem:[%s1 + $0x1d8] sm:$0xff]
    %v139 = vld [vmem:[%s1 + $0x1e0] sm:$0xff]
    %v140 = vld [vmem:[%s1 + $0x1e8] sm:$0xff]
    %v141 = vld [vmem:[%s1 + $0x1f0] sm:$0xff]
    %v142 = vld [vmem:[%s1 + $0x1f8] sm:$0xff]
    %v143 = vld [vmem:[%s1 + $0x200] sm:$0xff]
    %v144 = vld [vmem:[%s1 + $0x208] sm:$0xff]
    %v145 = vld [vmem:[%s1 + $0x210] sm:$0xff]
    %v146 = vld [vmem:[%s1 + $0x218] sm:$0xff]
    %v147 = vld [vmem:[%s1 + $0x220] sm:$0xff]
    %v148 = vld [vmem:[%s1 + $0x228] sm:$0xff]
    %v149 = vld [vmem:[%s1 + $0x230] sm:$0xff]
    %v150 = vld [vmem:[%s1 + $0x238] sm:$0xff]
    %v151 = vld [vmem:[%s1 + $0x240] sm:$0xff]
    %v152 = vld [vmem:[%s1 + $0x248] sm:$0xff]
    %v153 = vld [vmem:[%s1 + $0x250] sm:$0xff]
    %v154 = vld [vmem:[%s1 + $0x258] sm:$0xff]
    %v155 = vld [vmem:[%s1 + $0x260] sm:$0xff]
    %v156 = vld [vmem:[%s1 + $0x268] sm:$0xff]
    %v157 = vld [vmem:[%s1 + $0x270] sm:$0xff]
    %v158 = vld [vmem:[%s1 + $0x278] sm:$0xff]
    %v159 = vld [vmem:[%s1 + $0x280] sm:$0xff]
    %v160 = vld [vmem:[%s1 + $0x288] sm:$0xff]
    %v161 = vld [vmem:[%s1 + $0x290] sm:$0xff]
    %v162 = vld [vmem:[%s1 + $0x298] sm:$0xff]
    %v163 = vld [vmem:[%s1 + $0x2a0] sm:$0xff]
    %v164 = vld [vmem:[%s1 + $0x2a8] sm:$0xff]
    %v165 = vld [vmem:[%s1 + $0x2b0] sm:$0xff]
    %v166 = vld [vmem:[%s1 + $0x2b8] sm:$0xff]
    %v167 = vld [vmem:[%s1 + $0x2c0] sm:$0xff]
    %v168 = vld [vmem:[%s1 + $0x2c8] sm:$0xff]
    %v169 = vld [vmem:[%s1 + $0x2d0] sm:$0xff]
    %v170 = vld [vmem:[%s1 + $0x2d8] sm:$0xff]
    %v171 = vld [vmem:[%s1 + $0x2e0] sm:$0xff]
    %v172 = vld [vmem:[%s1 + $0x2e8] sm:$0xff]
    %v173 = vld [vmem:[%s1 + $0x2f0] sm:$0xff]
    %v174 = vld [vmem:[%s1 + $0x2f8] sm:$0xff]
    %v175 = vld [vmem:[%s1 + $0x300] sm:$0xff]
    %v176 = vld [vmem:[%s1 + $0x308] sm:$0xff]
    %v177 = vld [vmem:[%s1 + $0x310] sm:$0xff]
    %v178 = vld [vmem:[%s1 + $0x318] sm:$0xff]
    %v179 = vld [vmem:[%s1 + $0x320] sm:$0xff]
    %v180 = vld [vmem:[%s1 + $0x328] sm:$0xff]
    %v181 = vld [vmem:[%s1 + $0x330] sm:$0xff]
    %v182 = vld [vmem:[%s1 + $0x338] sm:$0xff]
    %v183 = vld [vmem:[%s1 + $0x340] sm:$0xff]
    %v184 = vld [vmem:[%s1 + $0x348] sm:$0xff]
    %v185 = vld [vmem:[%s1 + $0x350] sm:$0xff]
    %v186 = vld [vmem:[%s1 + $0x358] sm:$0xff]
    %v187 = vld [vmem:[%s1 + $0x360] sm:$0xff]
    %v188 = vld [vmem:[%s1 + $0x368] sm:$0xff]
    %v189 = vld [vmem:[%s1 + $0x370] sm:$0xff]
    %v190 = vld [vmem:[%s1 + $0x378] sm:$0xff]
    %v191 = vld [vmem:[%s1 + $0x380] sm:$0xff]
    %v192 = vld [vmem:[%s1 + $0x388] sm:$0xff]
    %v193 = vld [vmem:[%s1 + $0x390] sm:$0xff]
    %v194 = vld [vmem:[%s1 + $0x398] sm:$0xff]
    %v195 = vld [vmem:[%s1 + $0x3a0] sm:$0xff]
    %v196 = vld [vmem:[%s1 + $0x3a8] sm:$0xff]
    %v197 = vld [vmem:[%s1 + $0x3b0] sm:$0xff]
    %v198 = vld [vmem:[%s1 + $0x3b8] sm:$0xff]
    %v199 = vld [vmem:[%s1 + $0x3c0] sm:$0xff]
    %v200 = vld [vmem:[%s1 + $0x3c8] sm:$0xff]
    %v201 = vld [vmem:[%s1 + $0x3d0] sm:$0xff]
    %v202 = vld [vmem:[%s1 + $0x3d8] sm:$0xff]
    %v203 = vld [vmem:[%s1 + $0x3e0] sm:$0xff]
    %v204 = vld [vmem:[%s1 + $0x3e8] sm:$0xff]
    %v205 = vld [vmem:[%s1 + $0x3f0] sm:$0xff]
    %v206 = vld [vmem:[%s1 + $0x3f8] sm:$0xff]
    %v207 = vld [vmem:[%s1 + $0x400] sm:$0xff]
    %v208 = vld [vmem:[%s1 + $0x408] sm:$0xff]
    %v209 = vld [vmem:[%s1 + $0x410] sm:$0xff]
    %v210 = vld [vmem:[%s1 + $0x418] sm:$0xff]
    %v211 = vld [vmem:[%s1 + $0x420] sm:$0xff]
    %v212 = vld [vmem:[%s1 + $0x428] sm:$0xff]
    %v213 = vld [vmem:[%s1 + $0x430] sm:$0xff]
    %v214 = vld [vmem:[%s1 + $0x438] sm:$0xff]
    %v215 = vld [vmem:[%s1 + $0x440] sm:$0xff]
    %v216 = vld [vmem:[%s1 + $0x448] sm:$0xff]
    %v217 = vld [vmem:[%s1 + $0x450] sm:$0xff]
    %v218 = vld [vmem:[%s1 + $0x458] sm:$0xff]
    %v219 = vld [vmem:[%s1 + $0x460] sm:$0xff]
    %v220 = vld [vmem:[%s1 + $0x468] sm:$0xff]
    %v221 = vld [vmem:[%s1 + $0x470] sm:$0xff]
    %v222 = vld [vmem:[%s1 + $0x478] sm:$0xff]
    %v223 = vld [vmem:[%s1 + $0x480] sm:$0xff]
    %v224 = vld [vmem:[%s1 + $0x488] sm:$0xff]
    %v225 = vld [vmem:[%s1 + $0x490] sm:$0xff]
    %v226 = vld [vmem:[%s1 + $0x498] sm:$0xff]
    %v227 = vld [vmem:[%s1 + $0x4a0] sm:$0xff]
    %v228 = vld [vmem:[%s1 + $0x4a8] sm:$0xff]
    %v229 = vld [vmem:[%s1 + $0x4b0] sm:$0xff]
    %v230 = vld [vmem:[%s1 + $0x4b8] sm:$0xff]
    %v231 = vld [vmem:[%s1 + $0x4c0] sm:$0xff]
    %v232 = vld [vmem:[%s1 + $0x4c8] sm:$0xff]
    %v233 = vld [vmem:[%s1 + $0x4d0] sm:$0xff]
    %v234 = vld [vmem:[%s1 + $0x4d8] sm:$0xff]
    %v235 = vld [vmem:[%s1 + $0x4e0] sm:$0xff]
    %v236 = vld [vmem:[%s1 + $0x4e8] sm:$0xff]
    %v237 = vld [vmem:[%s1 + $0x4f0] sm:$0xff]
    %v238 = vld [vmem:[%s1 + $0x4f8] sm:$0xff]
    %v239 = vld [vmem:[%s1 + $0x500] sm:$0xff]
    %v240 = vld [vmem:[%s1 + $0x508] sm:$0xff]
    %v241 = vld [vmem:[%s1 + $0x510] sm:$0xff]
    %v242 = vld [vmem:[%s1 + $0x518] sm:$0xff]
    %v243 = vld [vmem:[%s1 + $0x520] sm:$0xff]
    %v244 = vld [vmem:[%s1 + $0x528] sm:$0xff]
    %v245 = vld [vmem:[%s1 + $0x530] sm:$0xff]
    %v246 = vld [vmem:[%s1 + $0x538] sm:$0xff]
    %v247 = vld [vmem:[%s1 + $0x540] sm:$0xff]
    %v248 = vld [vmem:[%s1 + $0x548] sm:$0xff]
    %v249 = vld [vmem:[%s1 + $0x550] sm:$0xff]
    %v250 = vld [vmem:[%s1 + $0x558] sm:$0xff]
    %v251 = vld [vmem:[%s1 + $0x560] sm:$0xff]
    %v252 = vld [vmem:[%s1 + $0x568] sm:$0xff]
    %v253 = vld [vmem:[%s1 + $0x570] sm:$0xff]
    %v254 = vld [vmem:[%s1 + $0x578] sm:$0xff]
    %v255 = vld [vmem:[%s1 + $0x580] sm:$0xff]
    %v256 = vld [vmem:[%s1 + $0x588] sm:$0xff]
    %v257 = vld [vmem:[%s1 + $0x590] sm:$0xff]
    %v258 = vld [vmem:[%s1 + $0x598] sm:$0xff]
    %v259 = vld [vmem:[%s1 + $0x5a0] sm:$0xff]
    %v260 = vld [vmem:[%s1 + $0x5a8] sm:$0xff]
    %v261 = vld [vmem:[%s1 + $0x5b0] sm:$0xff]
    %v262 = vld [vmem:[%s1 + $0x5b8] sm:$0xff]
    %v263 = vld [vmem:[%s1 + $0x5c0] sm:$0xff]
    %v264 = vld [vmem:[%s1 + $0x5c8] sm:$0xff]
    %v265 = vld [vmem:[%s1 + $0x5d0] sm:$0xff]
    %v266 = vld [vmem:[%s1 + $0x5d8] sm:$0xff]
    %v267 = vld [vmem:[%s1 + $0x5e0] sm:$0xff]
    %v268 = vld [vmem:[%s1 + $0x5e8] sm:$0xff]
    %v269 = vld [vmem:[%s1 + $0x5f0] sm:$0xff]
    %v270 = vld [vmem:[%s1 + $0x5f8] sm:$0xff]
    %v271 = vld [vmem:[%s1 + $0x600] sm:$0xff]
    %v272 = vld [vmem:[%s1 + $0x608] sm:$0xff]
    %v273 = vld [vmem:[%s1 + $0x610] sm:$0xff]
    %v274 = vld [vmem:[%s1 + $0x618] sm:$0xff]
    %v275 = vld [vmem:[%s1 + $0x620] sm:$0xff]
    %v276 = vld [vmem:[%s1 + $0x628] sm:$0xff]
    %v277 = vld [vmem:[%s1 + $0x630] sm:$0xff]
    %v278 = vld [vmem:[%s1 + $0x638] sm:$0xff]
    %v279 = vld [vmem:[%s1 + $0x640] sm:$0xff]
    %v280 = vld [vmem:[%s1 + $0x648] sm:$0xff]
    %v281 = vld [vmem:[%s1 + $0x650] sm:$0xff]
    %v282 = vld [vmem:[%s1 + $0x658] sm:$0xff]
    %v283 = vld [vmem:[%s1 + $0x660] sm:$0xff]
    %v284 = vld [vmem:[%s1 + $0x668] sm:$0xff]
    %v285 = vld [vmem:[%s1 + $0x670] sm:$0xff]
    %v286 = vld [vmem:[%s1 + $0x678] sm:$0xff]
    %v287 = vld [vmem:[%s1 + $0x680] sm:$0xff]
    %v288 = vld [vmem:[%s1 + $0x688] sm:$0xff]
    %v289 = vld [vmem:[%s1 + $0x690] sm:$0xff]
    %v290 = vld [vmem:[%s1 + $0x698] sm:$0xff]
    %v291 = vld [vmem:[%s1 + $0x6a0] sm:$0xff]
    %v292 = vld [vmem:[%s1 + $0x6a8] sm:$0xff]
    %v293 = vld [vmem:[%s1 + $0x6b0] sm:$0xff]
    %v294 = vld [vmem:[%s1 + $0x6b8] sm:$0xff]
    %v295 = vld [vmem:[%s1 + $0x6c0] sm:$0xff]
    %v296 = vld [vmem:[%s1 + $0x6c8] sm:$0xff]
    %v297 = vld [vmem:[%s1 + $0x6d0] sm:$0xff]
    %v298 = vld [vmem:[%s1 + $0x6d8] sm:$0xff]
    %v299 = vld [vmem:[%s1 + $0x6e0] sm:$0xff]
    %v300 = vld [vmem:[%s1 + $0x6e8] sm:$0xff]
    %v301 = vld [vmem:[%s1 + $0x6f0] sm:$0xff]
    %v302 = vld [vmem:[%s1 + $0x6f8] sm:$0xff]
    %v303 = vld [vmem:[%s1 + $0x700] sm:$0xff]
    %v304 = vld [vmem:[%s1 + $0x708] sm:$0xff]
    %v305 = vld [vmem:[%s1 + $0x710] sm:$0xff]
    %v306 = vld [vmem:[%s1 + $0x718] sm:$0xff]
    %v307 = vld [vmem:[%s1 + $0x720] sm:$0xff]
    %v308 = vld [vmem:[%s1 + $0x728] sm:$0xff]
    %v309 = vld [vmem:[%s1 + $0x730] sm:$0xff]
    %v310 = vld [vmem:[%s1 + $0x738] sm:$0xff]
    %v311 = vld [vmem:[%s1 + $0x740] sm:$0xff]
    %v312 = vld [vmem:[%s1 + $0x748] sm:$0xff]
    %v313 = vld [vmem:[%s1 + $0x750] sm:$0xff]
    %v314 = vld [vmem:[%s1 + $0x758] sm:$0xff]
    %v315 = vld [vmem:[%s1 + $0x760] sm:$0xff]
    %v316 = vld [vmem:[%s1 + $0x768] sm:$0xff]
    %v317 = vld [vmem:[%s1 + $0x770] sm:$0xff]
    %v318 = vld [vmem:[%s1 + $0x778] sm:$0xff]
    %v319 = vld [vmem:[%s1 + $0x780] sm:$0xff]
    %v320 = vld [vmem:[%s1 + $0x788] sm:$0xff]
    %v321 = vld [vmem:[%s1 + $0x790] sm:$0xff]
    %v322 = vld [vmem:[%s1 + $0x798] sm:$0xff]
    %v323 = vld [vmem:[%s1 + $0x7a0] sm:$0xff]
    %v324 = vld [vmem:[%s1 + $0x7a8] sm:$0xff]
    %v325 = vld [vmem:[%s1 + $0x7b0] sm:$0xff]
    %v326 = vld [vmem:[%s1 + $0x7b8] sm:$0xff]
    %v327 = vld [vmem:[%s1 + $0x7c0] sm:$0xff]
    %v328 = vld [vmem:[%s1 + $0x7c8] sm:$0xff]
    %v329 = vld [vmem:[%s1 + $0x7d0] sm:$0xff]
    %v330 = vld [vmem:[%s1 + $0x7d8] sm:$0xff]
    %v331 = vld [vmem:[%s1 + $0x7e0] sm:$0xff]
    %v332 = vld [vmem:[%s1 + $0x7e8] sm:$0xff]
    %v333 = vld [vmem:[%s1 + $0x7f0] sm:$0xff]
    %v334 = vld [vmem:[%s1 + $0x7f8] sm:$0xff]
    %v335 = vld [vmem:[%s4] ss:$8 sm:$0xf]
    %v337 = vlaneseq
    %v338 = vshrl.u32 %v337, 7
    %v339 = vsub.s32 0, %v338
    %v340 = vrot.slane %v335, %v339
    %v341 = vlaneseq
    %v342 = vshrl.u32 %v341, 7
    %v343 = vsub.s32 1, %v342
    %v344 = vrot.slane %v335, %v343
    %v345 = vlaneseq
    %v346 = vshrl.u32 %v345, 7
    %v347 = vsub.s32 2, %v346
    %v348 = vrot.slane %v335, %v347
    %v349 = vlaneseq
    %v350 = vshrl.u32 %v349, 7
    %v351 = vsub.s32 3, %v350
    %v352 = vrot.slane %v335, %v351
    %v613 = vunpack.c.l.b16 %v79
    %v614 = vunpack.c.h.b16 %v79
    %v615 = vunpack.c.l.b16 %v80
    %v616 = vunpack.c.h.b16 %v80
    %v617 = vunpack.c.l.b16 %v81
    %v618 = vunpack.c.h.b16 %v81
    %v619 = vunpack.c.l.b16 %v82
    %v620 = vunpack.c.h.b16 %v82
    %v621 = vunpack.c.l.b16 %v83
    %v622 = vunpack.c.h.b16 %v83
    %v623 = vunpack.c.l.b16 %v84
    %v624 = vunpack.c.h.b16 %v84
    %v625 = vunpack.c.l.b16 %v85
    %v626 = vunpack.c.h.b16 %v85
    %v627 = vunpack.c.l.b16 %v86
    %v628 = vunpack.c.h.b16 %v86
    %v629 = vunpack.c.l.b16 %v87
    %v630 = vunpack.c.h.b16 %v87
    %v631 = vunpack.c.l.b16 %v88
    %v632 = vunpack.c.h.b16 %v88
    %v633 = vunpack.c.l.b16 %v89
    %v634 = vunpack.c.h.b16 %v89
    %v635 = vunpack.c.l.b16 %v90
    %v636 = vunpack.c.h.b16 %v90
    %v637 = vunpack.c.l.b16 %v91
    %v638 = vunpack.c.h.b16 %v91
    %v639 = vunpack.c.l.b16 %v92
    %v640 = vunpack.c.h.b16 %v92
    %v641 = vunpack.c.l.b16 %v93
    %v642 = vunpack.c.h.b16 %v93
    %v643 = vunpack.c.l.b16 %v94
    %v644 = vunpack.c.h.b16 %v94
    %v645 = vunpack.c.l.b16 %v95
    %v646 = vunpack.c.h.b16 %v95
    %v647 = vunpack.c.l.b16 %v96
    %v648 = vunpack.c.h.b16 %v96
    %v649 = vunpack.c.l.b16 %v97
    %v650 = vunpack.c.h.b16 %v97
    %v651 = vunpack.c.l.b16 %v98
    %v652 = vunpack.c.h.b16 %v98
    %v653 = vunpack.c.l.b16 %v99
    %v654 = vunpack.c.h.b16 %v99
    %v655 = vunpack.c.l.b16 %v100
    %v656 = vunpack.c.h.b16 %v100
    %v657 = vunpack.c.l.b16 %v101
    %v658 = vunpack.c.h.b16 %v101
    %v659 = vunpack.c.l.b16 %v102
    %v660 = vunpack.c.h.b16 %v102
    %v661 = vunpack.c.l.b16 %v103
    %v662 = vunpack.c.h.b16 %v103
    %v663 = vunpack.c.l.b16 %v104
    %v664 = vunpack.c.h.b16 %v104
    %v665 = vunpack.c.l.b16 %v105
    %v666 = vunpack.c.h.b16 %v105
    %v667 = vunpack.c.l.b16 %v106
    %v668 = vunpack.c.h.b16 %v106
    %v669 = vunpack.c.l.b16 %v107
    %v670 = vunpack.c.h.b16 %v107
    %v671 = vunpack.c.l.b16 %v108
    %v672 = vunpack.c.h.b16 %v108
    %v673 = vunpack.c.l.b16 %v109
    %v674 = vunpack.c.h.b16 %v109
    %v675 = vunpack.c.l.b16 %v110
    %v676 = vunpack.c.h.b16 %v110
    %v677 = vunpack.c.l.b16 %v111
    %v678 = vunpack.c.h.b16 %v111
    %v679 = vunpack.c.l.b16 %v112
    %v680 = vunpack.c.h.b16 %v112
    %v681 = vunpack.c.l.b16 %v113
    %v682 = vunpack.c.h.b16 %v113
    %v683 = vunpack.c.l.b16 %v114
    %v684 = vunpack.c.h.b16 %v114
    %v685 = vunpack.c.l.b16 %v115
    %v686 = vunpack.c.h.b16 %v115
    %v687 = vunpack.c.l.b16 %v116
    %v688 = vunpack.c.h.b16 %v116
    %v689 = vunpack.c.l.b16 %v117
    %v690 = vunpack.c.h.b16 %v117
    %v691 = vunpack.c.l.b16 %v118
    %v692 = vunpack.c.h.b16 %v118
    %v693 = vunpack.c.l.b16 %v119
    %v694 = vunpack.c.h.b16 %v119
    %v695 = vunpack.c.l.b16 %v120
    %v696 = vunpack.c.h.b16 %v120
    %v697 = vunpack.c.l.b16 %v121
    %v698 = vunpack.c.h.b16 %v121
    %v699 = vunpack.c.l.b16 %v122
    %v700 = vunpack.c.h.b16 %v122
    %v701 = vunpack.c.l.b16 %v123
    %v702 = vunpack.c.h.b16 %v123
    %v703 = vunpack.c.l.b16 %v124
    %v704 = vunpack.c.h.b16 %v124
    %v705 = vunpack.c.l.b16 %v125
    %v706 = vunpack.c.h.b16 %v125
    %v707 = vunpack.c.l.b16 %v126
    %v708 = vunpack.c.h.b16 %v126
    %v709 = vunpack.c.l.b16 %v127
    %v710 = vunpack.c.h.b16 %v127
    %v711 = vunpack.c.l.b16 %v128
    %v712 = vunpack.c.h.b16 %v128
    %v713 = vunpack.c.l.b16 %v129
    %v714 = vunpack.c.h.b16 %v129
    %v715 = vunpack.c.l.b16 %v130
    %v716 = vunpack.c.h.b16 %v130
    %v717 = vunpack.c.l.b16 %v131
    %v718 = vunpack.c.h.b16 %v131
    %v719 = vunpack.c.l.b16 %v132
    %v720 = vunpack.c.h.b16 %v132
    %v721 = vunpack.c.l.b16 %v133
    %v722 = vunpack.c.h.b16 %v133
    %v723 = vunpack.c.l.b16 %v134
    %v724 = vunpack.c.h.b16 %v134
    %v725 = vunpack.c.l.b16 %v135
    %v726 = vunpack.c.h.b16 %v135
    %v727 = vunpack.c.l.b16 %v136
    %v728 = vunpack.c.h.b16 %v136
    %v729 = vunpack.c.l.b16 %v137
    %v730 = vunpack.c.h.b16 %v137
    %v731 = vunpack.c.l.b16 %v138
    %v732 = vunpack.c.h.b16 %v138
    %v733 = vunpack.c.l.b16 %v139
    %v734 = vunpack.c.h.b16 %v139
    %v735 = vunpack.c.l.b16 %v140
    %v736 = vunpack.c.h.b16 %v140
    %v737 = vunpack.c.l.b16 %v141
    %v738 = vunpack.c.h.b16 %v141
    %v739 = vunpack.c.l.b16 %v142
    %v740 = vunpack.c.h.b16 %v142
    %v741 = vunpack.c.l.b16 %v143
    %v742 = vunpack.c.h.b16 %v143
    %v743 = vunpack.c.l.b16 %v144
    %v744 = vunpack.c.h.b16 %v144
    %v745 = vunpack.c.l.b16 %v145
    %v746 = vunpack.c.h.b16 %v145
    %v747 = vunpack.c.l.b16 %v146
    %v748 = vunpack.c.h.b16 %v146
    %v749 = vunpack.c.l.b16 %v147
    %v750 = vunpack.c.h.b16 %v147
    %v751 = vunpack.c.l.b16 %v148
    %v752 = vunpack.c.h.b16 %v148
    %v753 = vunpack.c.l.b16 %v149
    %v754 = vunpack.c.h.b16 %v149
    %v755 = vunpack.c.l.b16 %v150
    %v756 = vunpack.c.h.b16 %v150
    %v757 = vunpack.c.l.b16 %v151
    %v758 = vunpack.c.h.b16 %v151
    %v759 = vunpack.c.l.b16 %v152
    %v760 = vunpack.c.h.b16 %v152
    %v761 = vunpack.c.l.b16 %v153
    %v762 = vunpack.c.h.b16 %v153
    %v763 = vunpack.c.l.b16 %v154
    %v764 = vunpack.c.h.b16 %v154
    %v765 = vunpack.c.l.b16 %v155
    %v766 = vunpack.c.h.b16 %v155
    %v767 = vunpack.c.l.b16 %v156
    %v768 = vunpack.c.h.b16 %v156
    %v769 = vunpack.c.l.b16 %v157
    %v770 = vunpack.c.h.b16 %v157
    %v771 = vunpack.c.l.b16 %v158
    %v772 = vunpack.c.h.b16 %v158
    %v773 = vunpack.c.l.b16 %v159
    %v774 = vunpack.c.h.b16 %v159
    %v775 = vunpack.c.l.b16 %v160
    %v776 = vunpack.c.h.b16 %v160
    %v777 = vunpack.c.l.b16 %v161
    %v778 = vunpack.c.h.b16 %v161
    %v779 = vunpack.c.l.b16 %v162
    %v780 = vunpack.c.h.b16 %v162
    %v781 = vunpack.c.l.b16 %v163
    %v782 = vunpack.c.h.b16 %v163
    %v783 = vunpack.c.l.b16 %v164
    %v784 = vunpack.c.h.b16 %v164
    %v785 = vunpack.c.l.b16 %v165
    %v786 = vunpack.c.h.b16 %v165
    %v787 = vunpack.c.l.b16 %v166
    %v788 = vunpack.c.h.b16 %v166
    %v789 = vunpack.c.l.b16 %v167
    %v790 = vunpack.c.h.b16 %v167
    %v791 = vunpack.c.l.b16 %v168
    %v792 = vunpack.c.h.b16 %v168
    %v793 = vunpack.c.l.b16 %v169
    %v794 = vunpack.c.h.b16 %v169
    %v795 = vunpack.c.l.b16 %v170
    %v796 = vunpack.c.h.b16 %v170
    %v797 = vunpack.c.l.b16 %v171
    %v798 = vunpack.c.h.b16 %v171
    %v799 = vunpack.c.l.b16 %v172
    %v800 = vunpack.c.h.b16 %v172
    %v801 = vunpack.c.l.b16 %v173
    %v802 = vunpack.c.h.b16 %v173
    %v803 = vunpack.c.l.b16 %v174
    %v804 = vunpack.c.h.b16 %v174
    %v805 = vunpack.c.l.b16 %v175
    %v806 = vunpack.c.h.b16 %v175
    %v807 = vunpack.c.l.b16 %v176
    %v808 = vunpack.c.h.b16 %v176
    %v809 = vunpack.c.l.b16 %v177
    %v810 = vunpack.c.h.b16 %v177
    %v811 = vunpack.c.l.b16 %v178
    %v812 = vunpack.c.h.b16 %v178
    %v813 = vunpack.c.l.b16 %v179
    %v814 = vunpack.c.h.b16 %v179
    %v815 = vunpack.c.l.b16 %v180
    %v816 = vunpack.c.h.b16 %v180
    %v817 = vunpack.c.l.b16 %v181
    %v818 = vunpack.c.h.b16 %v181
    %v819 = vunpack.c.l.b16 %v182
    %v820 = vunpack.c.h.b16 %v182
    %v821 = vunpack.c.l.b16 %v183
    %v822 = vunpack.c.h.b16 %v183
    %v823 = vunpack.c.l.b16 %v184
    %v824 = vunpack.c.h.b16 %v184
    %v825 = vunpack.c.l.b16 %v185
    %v826 = vunpack.c.h.b16 %v185
    %v827 = vunpack.c.l.b16 %v186
    %v828 = vunpack.c.h.b16 %v186
    %v829 = vunpack.c.l.b16 %v187
    %v830 = vunpack.c.h.b16 %v187
    %v831 = vunpack.c.l.b16 %v188
    %v832 = vunpack.c.h.b16 %v188
    %v833 = vunpack.c.l.b16 %v189
    %v834 = vunpack.c.h.b16 %v189
    %v835 = vunpack.c.l.b16 %v190
    %v836 = vunpack.c.h.b16 %v190
    %v837 = vunpack.c.l.b16 %v191
    %v838 = vunpack.c.h.b16 %v191
    %v839 = vunpack.c.l.b16 %v192
    %v840 = vunpack.c.h.b16 %v192
    %v841 = vunpack.c.l.b16 %v193
    %v842 = vunpack.c.h.b16 %v193
    %v843 = vunpack.c.l.b16 %v194
    %v844 = vunpack.c.h.b16 %v194
    %v845 = vunpack.c.l.b16 %v195
    %v846 = vunpack.c.h.b16 %v195
    %v847 = vunpack.c.l.b16 %v196
    %v848 = vunpack.c.h.b16 %v196
    %v849 = vunpack.c.l.b16 %v197
    %v850 = vunpack.c.h.b16 %v197
    %v851 = vunpack.c.l.b16 %v198
    %v852 = vunpack.c.h.b16 %v198
    %v853 = vunpack.c.l.b16 %v199
    %v854 = vunpack.c.h.b16 %v199
    %v855 = vunpack.c.l.b16 %v200
    %v856 = vunpack.c.h.b16 %v200
    %v857 = vunpack.c.l.b16 %v201
    %v858 = vunpack.c.h.b16 %v201
    %v859 = vunpack.c.l.b16 %v202
    %v860 = vunpack.c.h.b16 %v202
    %v861 = vunpack.c.l.b16 %v203
    %v862 = vunpack.c.h.b16 %v203
    %v863 = vunpack.c.l.b16 %v204
    %v864 = vunpack.c.h.b16 %v204
    %v865 = vunpack.c.l.b16 %v205
    %v866 = vunpack.c.h.b16 %v205
    %v867 = vunpack.c.l.b16 %v206
    %v868 = vunpack.c.h.b16 %v206
    %v869 = vunpack.c.l.b16 %v207
    %v870 = vunpack.c.h.b16 %v207
    %v871 = vunpack.c.l.b16 %v208
    %v872 = vunpack.c.h.b16 %v208
    %v873 = vunpack.c.l.b16 %v209
    %v874 = vunpack.c.h.b16 %v209
    %v875 = vunpack.c.l.b16 %v210
    %v876 = vunpack.c.h.b16 %v210
    %v877 = vunpack.c.l.b16 %v211
    %v878 = vunpack.c.h.b16 %v211
    %v879 = vunpack.c.l.b16 %v212
    %v880 = vunpack.c.h.b16 %v212
    %v881 = vunpack.c.l.b16 %v213
    %v882 = vunpack.c.h.b16 %v213
    %v883 = vunpack.c.l.b16 %v214
    %v884 = vunpack.c.h.b16 %v214
    %v885 = vunpack.c.l.b16 %v215
    %v886 = vunpack.c.h.b16 %v215
    %v887 = vunpack.c.l.b16 %v216
    %v888 = vunpack.c.h.b16 %v216
    %v889 = vunpack.c.l.b16 %v217
    %v890 = vunpack.c.h.b16 %v217
    %v891 = vunpack.c.l.b16 %v218
    %v892 = vunpack.c.h.b16 %v218
    %v893 = vunpack.c.l.b16 %v219
    %v894 = vunpack.c.h.b16 %v219
    %v895 = vunpack.c.l.b16 %v220
    %v896 = vunpack.c.h.b16 %v220
    %v897 = vunpack.c.l.b16 %v221
    %v898 = vunpack.c.h.b16 %v221
    %v899 = vunpack.c.l.b16 %v222
    %v900 = vunpack.c.h.b16 %v222
    %v901 = vunpack.c.l.b16 %v223
    %v902 = vunpack.c.h.b16 %v223
    %v903 = vunpack.c.l.b16 %v224
    %v904 = vunpack.c.h.b16 %v224
    %v905 = vunpack.c.l.b16 %v225
    %v906 = vunpack.c.h.b16 %v225
    %v907 = vunpack.c.l.b16 %v226
    %v908 = vunpack.c.h.b16 %v226
    %v909 = vunpack.c.l.b16 %v227
    %v910 = vunpack.c.h.b16 %v227
    %v911 = vunpack.c.l.b16 %v228
    %v912 = vunpack.c.h.b16 %v228
    %v913 = vunpack.c.l.b16 %v229
    %v914 = vunpack.c.h.b16 %v229
    %v915 = vunpack.c.l.b16 %v230
    %v916 = vunpack.c.h.b16 %v230
    %v917 = vunpack.c.l.b16 %v231
    %v918 = vunpack.c.h.b16 %v231
    %v919 = vunpack.c.l.b16 %v232
    %v920 = vunpack.c.h.b16 %v232
    %v921 = vunpack.c.l.b16 %v233
    %v922 = vunpack.c.h.b16 %v233
    %v923 = vunpack.c.l.b16 %v234
    %v924 = vunpack.c.h.b16 %v234
    %v925 = vunpack.c.l.b16 %v235
    %v926 = vunpack.c.h.b16 %v235
    %v927 = vunpack.c.l.b16 %v236
    %v928 = vunpack.c.h.b16 %v236
    %v929 = vunpack.c.l.b16 %v237
    %v930 = vunpack.c.h.b16 %v237
    %v931 = vunpack.c.l.b16 %v238
    %v932 = vunpack.c.h.b16 %v238
    %v933 = vunpack.c.l.b16 %v239
    %v934 = vunpack.c.h.b16 %v239
    %v935 = vunpack.c.l.b16 %v240
    %v936 = vunpack.c.h.b16 %v240
    %v937 = vunpack.c.l.b16 %v241
    %v938 = vunpack.c.h.b16 %v241
    %v939 = vunpack.c.l.b16 %v242
    %v940 = vunpack.c.h.b16 %v242
    %v941 = vunpack.c.l.b16 %v243
    %v942 = vunpack.c.h.b16 %v243
    %v943 = vunpack.c.l.b16 %v244
    %v944 = vunpack.c.h.b16 %v244
    %v945 = vunpack.c.l.b16 %v245
    %v946 = vunpack.c.h.b16 %v245
    %v947 = vunpack.c.l.b16 %v246
    %v948 = vunpack.c.h.b16 %v246
    %v949 = vunpack.c.l.b16 %v247
    %v950 = vunpack.c.h.b16 %v247
    %v951 = vunpack.c.l.b16 %v248
    %v952 = vunpack.c.h.b16 %v248
    %v953 = vunpack.c.l.b16 %v249
    %v954 = vunpack.c.h.b16 %v249
    %v955 = vunpack.c.l.b16 %v250
    %v956 = vunpack.c.h.b16 %v250
    %v957 = vunpack.c.l.b16 %v251
    %v958 = vunpack.c.h.b16 %v251
    %v959 = vunpack.c.l.b16 %v252
    %v960 = vunpack.c.h.b16 %v252
    %v961 = vunpack.c.l.b16 %v253
    %v962 = vunpack.c.h.b16 %v253
    %v963 = vunpack.c.l.b16 %v254
    %v964 = vunpack.c.h.b16 %v254
    %v965 = vunpack.c.l.b16 %v255
    %v966 = vunpack.c.h.b16 %v255
    %v967 = vunpack.c.l.b16 %v256
    %v968 = vunpack.c.h.b16 %v256
    %v969 = vunpack.c.l.b16 %v257
    %v970 = vunpack.c.h.b16 %v257
    %v971 = vunpack.c.l.b16 %v258
    %v972 = vunpack.c.h.b16 %v258
    %v973 = vunpack.c.l.b16 %v259
    %v974 = vunpack.c.h.b16 %v259
    %v975 = vunpack.c.l.b16 %v260
    %v976 = vunpack.c.h.b16 %v260
    %v977 = vunpack.c.l.b16 %v261
    %v978 = vunpack.c.h.b16 %v261
    %v979 = vunpack.c.l.b16 %v262
    %v980 = vunpack.c.h.b16 %v262
    %v981 = vunpack.c.l.b16 %v263
    %v982 = vunpack.c.h.b16 %v263
    %v983 = vunpack.c.l.b16 %v264
    %v984 = vunpack.c.h.b16 %v264
    %v985 = vunpack.c.l.b16 %v265
    %v986 = vunpack.c.h.b16 %v265
    %v987 = vunpack.c.l.b16 %v266
    %v988 = vunpack.c.h.b16 %v266
    %v989 = vunpack.c.l.b16 %v267
    %v990 = vunpack.c.h.b16 %v267
    %v991 = vunpack.c.l.b16 %v268
    %v992 = vunpack.c.h.b16 %v268
    %v993 = vunpack.c.l.b16 %v269
    %v994 = vunpack.c.h.b16 %v269
    %v995 = vunpack.c.l.b16 %v270
    %v996 = vunpack.c.h.b16 %v270
    %v997 = vunpack.c.l.b16 %v271
    %v998 = vunpack.c.h.b16 %v271
    %v999 = vunpack.c.l.b16 %v272
    %v1000 = vunpack.c.h.b16 %v272
    %v1001 = vunpack.c.l.b16 %v273
    %v1002 = vunpack.c.h.b16 %v273
    %v1003 = vunpack.c.l.b16 %v274
    %v1004 = vunpack.c.h.b16 %v274
    %v1005 = vunpack.c.l.b16 %v275
    %v1006 = vunpack.c.h.b16 %v275
    %v1007 = vunpack.c.l.b16 %v276
    %v1008 = vunpack.c.h.b16 %v276
    %v1009 = vunpack.c.l.b16 %v277
    %v1010 = vunpack.c.h.b16 %v277
    %v1011 = vunpack.c.l.b16 %v278
    %v1012 = vunpack.c.h.b16 %v278
    %v1013 = vunpack.c.l.b16 %v279
    %v1014 = vunpack.c.h.b16 %v279
    %v1015 = vunpack.c.l.b16 %v280
    %v1016 = vunpack.c.h.b16 %v280
    %v1017 = vunpack.c.l.b16 %v281
    %v1018 = vunpack.c.h.b16 %v281
    %v1019 = vunpack.c.l.b16 %v282
    %v1020 = vunpack.c.h.b16 %v282
    %v1021 = vunpack.c.l.b16 %v283
    %v1022 = vunpack.c.h.b16 %v283
    %v1023 = vunpack.c.l.b16 %v284
    %v1024 = vunpack.c.h.b16 %v284
    %v1025 = vunpack.c.l.b16 %v285
    %v1026 = vunpack.c.h.b16 %v285
    %v1027 = vunpack.c.l.b16 %v286
    %v1028 = vunpack.c.h.b16 %v286
    %v1029 = vunpack.c.l.b16 %v287
    %v1030 = vunpack.c.h.b16 %v287
    %v1031 = vunpack.c.l.b16 %v288
    %v1032 = vunpack.c.h.b16 %v288
    %v1033 = vunpack.c.l.b16 %v289
    %v1034 = vunpack.c.h.b16 %v289
    %v1035 = vunpack.c.l.b16 %v290
    %v1036 = vunpack.c.h.b16 %v290
    %v1037 = vunpack.c.l.b16 %v291
    %v1038 = vunpack.c.h.b16 %v291
    %v1039 = vunpack.c.l.b16 %v292
    %v1040 = vunpack.c.h.b16 %v292
    %v1041 = vunpack.c.l.b16 %v293
    %v1042 = vunpack.c.h.b16 %v293
    %v1043 = vunpack.c.l.b16 %v294
    %v1044 = vunpack.c.h.b16 %v294
    %v1045 = vunpack.c.l.b16 %v295
    %v1046 = vunpack.c.h.b16 %v295
    %v1047 = vunpack.c.l.b16 %v296
    %v1048 = vunpack.c.h.b16 %v296
    %v1049 = vunpack.c.l.b16 %v297
    %v1050 = vunpack.c.h.b16 %v297
    %v1051 = vunpack.c.l.b16 %v298
    %v1052 = vunpack.c.h.b16 %v298
    %v1053 = vunpack.c.l.b16 %v299
    %v1054 = vunpack.c.h.b16 %v299
    %v1055 = vunpack.c.l.b16 %v300
    %v1056 = vunpack.c.h.b16 %v300
    %v1057 = vunpack.c.l.b16 %v301
    %v1058 = vunpack.c.h.b16 %v301
    %v1059 = vunpack.c.l.b16 %v302
    %v1060 = vunpack.c.h.b16 %v302
    %v1061 = vunpack.c.l.b16 %v303
    %v1062 = vunpack.c.h.b16 %v303
    %v1063 = vunpack.c.l.b16 %v304
    %v1064 = vunpack.c.h.b16 %v304
    %v1065 = vunpack.c.l.b16 %v305
    %v1066 = vunpack.c.h.b16 %v305
    %v1067 = vunpack.c.l.b16 %v306
    %v1068 = vunpack.c.h.b16 %v306
    %v1069 = vunpack.c.l.b16 %v307
    %v1070 = vunpack.c.h.b16 %v307
    %v1071 = vunpack.c.l.b16 %v308
    %v1072 = vunpack.c.h.b16 %v308
    %v1073 = vunpack.c.l.b16 %v309
    %v1074 = vunpack.c.h.b16 %v309
    %v1075 = vunpack.c.l.b16 %v310
    %v1076 = vunpack.c.h.b16 %v310
    %v1077 = vunpack.c.l.b16 %v311
    %v1078 = vunpack.c.h.b16 %v311
    %v1079 = vunpack.c.l.b16 %v312
    %v1080 = vunpack.c.h.b16 %v312
    %v1081 = vunpack.c.l.b16 %v313
    %v1082 = vunpack.c.h.b16 %v313
    %v1083 = vunpack.c.l.b16 %v314
    %v1084 = vunpack.c.h.b16 %v314
    %v1085 = vunpack.c.l.b16 %v315
    %v1086 = vunpack.c.h.b16 %v315
    %v1087 = vunpack.c.l.b16 %v316
    %v1088 = vunpack.c.h.b16 %v316
    %v1089 = vunpack.c.l.b16 %v317
    %v1090 = vunpack.c.h.b16 %v317
    %v1091 = vunpack.c.l.b16 %v318
    %v1092 = vunpack.c.h.b16 %v318
    %v1093 = vunpack.c.l.b16 %v319
    %v1094 = vunpack.c.h.b16 %v319
    %v1095 = vunpack.c.l.b16 %v320
    %v1096 = vunpack.c.h.b16 %v320
    %v1097 = vunpack.c.l.b16 %v321
    %v1098 = vunpack.c.h.b16 %v321
    %v1099 = vunpack.c.l.b16 %v322
    %v1100 = vunpack.c.h.b16 %v322
    %v1101 = vunpack.c.l.b16 %v323
    %v1102 = vunpack.c.h.b16 %v323
    %v1103 = vunpack.c.l.b16 %v324
    %v1104 = vunpack.c.h.b16 %v324
    %v1105 = vunpack.c.l.b16 %v325
    %v1106 = vunpack.c.h.b16 %v325
    %v1107 = vunpack.c.l.b16 %v326
    %v1108 = vunpack.c.h.b16 %v326
    %v1109 = vunpack.c.l.b16 %v327
    %v1110 = vunpack.c.h.b16 %v327
    %v1111 = vunpack.c.l.b16 %v328
    %v1112 = vunpack.c.h.b16 %v328
    %v1113 = vunpack.c.l.b16 %v329
    %v1114 = vunpack.c.h.b16 %v329
    %v1115 = vunpack.c.l.b16 %v330
    %v1116 = vunpack.c.h.b16 %v330
    %v1117 = vunpack.c.l.b16 %v331
    %v1118 = vunpack.c.h.b16 %v331
    %v1119 = vunpack.c.l.b16 %v332
    %v1120 = vunpack.c.h.b16 %v332
    %v1121 = vunpack.c.l.b16 %v333
    %v1122 = vunpack.c.h.b16 %v333
    %v1123 = vunpack.c.l.b16 %v334
    %v1124 = vunpack.c.h.b16 %v334
    %v1125 = vpack.c.b16 %v617, %v613
    %v1126 = vpack.c.b16 %v618, %v614
    %v1127 = vpack.c.b16 %v619, %v615
    %v1128 = vpack.c.b16 %v620, %v616
    %v1129 = vpack.c.b16 %v625, %v621
    %v1130 = vpack.c.b16 %v626, %v622
    %v1131 = vpack.c.b16 %v627, %v623
    %v1132 = vpack.c.b16 %v628, %v624
    %v1133 = vpack.c.b16 %v633, %v629
    %v1134 = vpack.c.b16 %v634, %v630
    %v1135 = vpack.c.b16 %v635, %v631
    %v1136 = vpack.c.b16 %v636, %v632
    %v1137 = vpack.c.b16 %v641, %v637
    %v1138 = vpack.c.b16 %v642, %v638
    %v1139 = vpack.c.b16 %v643, %v639
    %v1140 = vpack.c.b16 %v644, %v640
    %v1141 = vpack.c.b16 %v649, %v645
    %v1142 = vpack.c.b16 %v650, %v646
    %v1143 = vpack.c.b16 %v651, %v647
    %v1144 = vpack.c.b16 %v652, %v648
    %v1145 = vpack.c.b16 %v657, %v653
    %v1146 = vpack.c.b16 %v658, %v654
    %v1147 = vpack.c.b16 %v659, %v655
    %v1148 = vpack.c.b16 %v660, %v656
    %v1149 = vpack.c.b16 %v665, %v661
    %v1150 = vpack.c.b16 %v666, %v662
    %v1151 = vpack.c.b16 %v667, %v663
    %v1152 = vpack.c.b16 %v668, %v664
    %v1153 = vpack.c.b16 %v673, %v669
    %v1154 = vpack.c.b16 %v674, %v670
    %v1155 = vpack.c.b16 %v675, %v671
    %v1156 = vpack.c.b16 %v676, %v672
    %v1157 = vpack.c.b16 %v681, %v677
    %v1158 = vpack.c.b16 %v682, %v678
    %v1159 = vpack.c.b16 %v683, %v679
    %v1160 = vpack.c.b16 %v684, %v680
    %v1161 = vpack.c.b16 %v689, %v685
    %v1162 = vpack.c.b16 %v690, %v686
    %v1163 = vpack.c.b16 %v691, %v687
    %v1164 = vpack.c.b16 %v692, %v688
    %v1165 = vpack.c.b16 %v697, %v693
    %v1166 = vpack.c.b16 %v698, %v694
    %v1167 = vpack.c.b16 %v699, %v695
    %v1168 = vpack.c.b16 %v700, %v696
    %v1169 = vpack.c.b16 %v705, %v701
    %v1170 = vpack.c.b16 %v706, %v702
    %v1171 = vpack.c.b16 %v707, %v703
    %v1172 = vpack.c.b16 %v708, %v704
    %v1173 = vpack.c.b16 %v713, %v709
    %v1174 = vpack.c.b16 %v714, %v710
    %v1175 = vpack.c.b16 %v715, %v711
    %v1176 = vpack.c.b16 %v716, %v712
    %v1177 = vpack.c.b16 %v721, %v717
    %v1178 = vpack.c.b16 %v722, %v718
    %v1179 = vpack.c.b16 %v723, %v719
    %v1180 = vpack.c.b16 %v724, %v720
    %v1181 = vpack.c.b16 %v729, %v725
    %v1182 = vpack.c.b16 %v730, %v726
    %v1183 = vpack.c.b16 %v731, %v727
    %v1184 = vpack.c.b16 %v732, %v728
    %v1185 = vpack.c.b16 %v737, %v733
    %v1186 = vpack.c.b16 %v738, %v734
    %v1187 = vpack.c.b16 %v739, %v735
    %v1188 = vpack.c.b16 %v740, %v736
    %v1189 = vpack.c.b16 %v745, %v741
    %v1190 = vpack.c.b16 %v746, %v742
    %v1191 = vpack.c.b16 %v747, %v743
    %v1192 = vpack.c.b16 %v748, %v744
    %v1193 = vpack.c.b16 %v753, %v749
    %v1194 = vpack.c.b16 %v754, %v750
    %v1195 = vpack.c.b16 %v755, %v751
    %v1196 = vpack.c.b16 %v756, %v752
    %v1197 = vpack.c.b16 %v761, %v757
    %v1198 = vpack.c.b16 %v762, %v758
    %v1199 = vpack.c.b16 %v763, %v759
    %v1200 = vpack.c.b16 %v764, %v760
    %v1201 = vpack.c.b16 %v769, %v765
    %v1202 = vpack.c.b16 %v770, %v766
    %v1203 = vpack.c.b16 %v771, %v767
    %v1204 = vpack.c.b16 %v772, %v768
    %v1205 = vpack.c.b16 %v777, %v773
    %v1206 = vpack.c.b16 %v778, %v774
    %v1207 = vpack.c.b16 %v779, %v775
    %v1208 = vpack.c.b16 %v780, %v776
    %v1209 = vpack.c.b16 %v785, %v781
    %v1210 = vpack.c.b16 %v786, %v782
    %v1211 = vpack.c.b16 %v787, %v783
    %v1212 = vpack.c.b16 %v788, %v784
    %v1213 = vpack.c.b16 %v793, %v789
    %v1214 = vpack.c.b16 %v794, %v790
    %v1215 = vpack.c.b16 %v795, %v791
    %v1216 = vpack.c.b16 %v796, %v792
    %v1217 = vpack.c.b16 %v801, %v797
    %v1218 = vpack.c.b16 %v802, %v798
    %v1219 = vpack.c.b16 %v803, %v799
    %v1220 = vpack.c.b16 %v804, %v800
    %v1221 = vpack.c.b16 %v809, %v805
    %v1222 = vpack.c.b16 %v810, %v806
    %v1223 = vpack.c.b16 %v811, %v807
    %v1224 = vpack.c.b16 %v812, %v808
    %v1225 = vpack.c.b16 %v817, %v813
    %v1226 = vpack.c.b16 %v818, %v814
    %v1227 = vpack.c.b16 %v819, %v815
    %v1228 = vpack.c.b16 %v820, %v816
    %v1229 = vpack.c.b16 %v825, %v821
    %v1230 = vpack.c.b16 %v826, %v822
    %v1231 = vpack.c.b16 %v827, %v823
    %v1232 = vpack.c.b16 %v828, %v824
    %v1233 = vpack.c.b16 %v833, %v829
    %v1234 = vpack.c.b16 %v834, %v830
    %v1235 = vpack.c.b16 %v835, %v831
    %v1236 = vpack.c.b16 %v836, %v832
    %v1237 = vpack.c.b16 %v841, %v837
    %v1238 = vpack.c.b16 %v842, %v838
    %v1239 = vpack.c.b16 %v843, %v839
    %v1240 = vpack.c.b16 %v844, %v840
    %v1241 = vpack.c.b16 %v849, %v845
    %v1242 = vpack.c.b16 %v850, %v846
    %v1243 = vpack.c.b16 %v851, %v847
    %v1244 = vpack.c.b16 %v852, %v848
    %v1245 = vpack.c.b16 %v857, %v853
    %v1246 = vpack.c.b16 %v858, %v854
    %v1247 = vpack.c.b16 %v859, %v855
    %v1248 = vpack.c.b16 %v860, %v856
    %v1249 = vpack.c.b16 %v865, %v861
    %v1250 = vpack.c.b16 %v866, %v862
    %v1251 = vpack.c.b16 %v867, %v863
    %v1252 = vpack.c.b16 %v868, %v864
    %v1253 = vpack.c.b16 %v873, %v869
    %v1254 = vpack.c.b16 %v874, %v870
    %v1255 = vpack.c.b16 %v875, %v871
    %v1256 = vpack.c.b16 %v876, %v872
    %v1257 = vpack.c.b16 %v881, %v877
    %v1258 = vpack.c.b16 %v882, %v878
    %v1259 = vpack.c.b16 %v883, %v879
    %v1260 = vpack.c.b16 %v884, %v880
    %v1261 = vpack.c.b16 %v889, %v885
    %v1262 = vpack.c.b16 %v890, %v886
    %v1263 = vpack.c.b16 %v891, %v887
    %v1264 = vpack.c.b16 %v892, %v888
    %v1265 = vpack.c.b16 %v897, %v893
    %v1266 = vpack.c.b16 %v898, %v894
    %v1267 = vpack.c.b16 %v899, %v895
    %v1268 = vpack.c.b16 %v900, %v896
    %v1269 = vpack.c.b16 %v905, %v901
    %v1270 = vpack.c.b16 %v906, %v902
    %v1271 = vpack.c.b16 %v907, %v903
    %v1272 = vpack.c.b16 %v908, %v904
    %v1273 = vpack.c.b16 %v913, %v909
    %v1274 = vpack.c.b16 %v914, %v910
    %v1275 = vpack.c.b16 %v915, %v911
    %v1276 = vpack.c.b16 %v916, %v912
    %v1277 = vpack.c.b16 %v921, %v917
    %v1278 = vpack.c.b16 %v922, %v918
    %v1279 = vpack.c.b16 %v923, %v919
    %v1280 = vpack.c.b16 %v924, %v920
    %v1281 = vpack.c.b16 %v929, %v925
    %v1282 = vpack.c.b16 %v930, %v926
    %v1283 = vpack.c.b16 %v931, %v927
    %v1284 = vpack.c.b16 %v932, %v928
    %v1285 = vpack.c.b16 %v937, %v933
    %v1286 = vpack.c.b16 %v938, %v934
    %v1287 = vpack.c.b16 %v939, %v935
    %v1288 = vpack.c.b16 %v940, %v936
    %v1289 = vpack.c.b16 %v945, %v941
    %v1290 = vpack.c.b16 %v946, %v942
    %v1291 = vpack.c.b16 %v947, %v943
    %v1292 = vpack.c.b16 %v948, %v944
    %v1293 = vpack.c.b16 %v953, %v949
    %v1294 = vpack.c.b16 %v954, %v950
    %v1295 = vpack.c.b16 %v955, %v951
    %v1296 = vpack.c.b16 %v956, %v952
    %v1297 = vpack.c.b16 %v961, %v957
    %v1298 = vpack.c.b16 %v962, %v958
    %v1299 = vpack.c.b16 %v963, %v959
    %v1300 = vpack.c.b16 %v964, %v960
    %v1301 = vpack.c.b16 %v969, %v965
    %v1302 = vpack.c.b16 %v970, %v966
    %v1303 = vpack.c.b16 %v971, %v967
    %v1304 = vpack.c.b16 %v972, %v968
    %v1305 = vpack.c.b16 %v977, %v973
    %v1306 = vpack.c.b16 %v978, %v974
    %v1307 = vpack.c.b16 %v979, %v975
    %v1308 = vpack.c.b16 %v980, %v976
    %v1309 = vpack.c.b16 %v985, %v981
    %v1310 = vpack.c.b16 %v986, %v982
    %v1311 = vpack.c.b16 %v987, %v983
    %v1312 = vpack.c.b16 %v988, %v984
    %v1313 = vpack.c.b16 %v993, %v989
    %v1314 = vpack.c.b16 %v994, %v990
    %v1315 = vpack.c.b16 %v995, %v991
    %v1316 = vpack.c.b16 %v996, %v992
    %v1317 = vpack.c.b16 %v1001, %v997
    %v1318 = vpack.c.b16 %v1002, %v998
    %v1319 = vpack.c.b16 %v1003, %v999
    %v1320 = vpack.c.b16 %v1004, %v1000
    %v1321 = vpack.c.b16 %v1009, %v1005
    %v1322 = vpack.c.b16 %v1010, %v1006
    %v1323 = vpack.c.b16 %v1011, %v1007
    %v1324 = vpack.c.b16 %v1012, %v1008
    %v1325 = vpack.c.b16 %v1017, %v1013
    %v1326 = vpack.c.b16 %v1018, %v1014
    %v1327 = vpack.c.b16 %v1019, %v1015
    %v1328 = vpack.c.b16 %v1020, %v1016
    %v1329 = vpack.c.b16 %v1025, %v1021
    %v1330 = vpack.c.b16 %v1026, %v1022
    %v1331 = vpack.c.b16 %v1027, %v1023
    %v1332 = vpack.c.b16 %v1028, %v1024
    %v1333 = vpack.c.b16 %v1033, %v1029
    %v1334 = vpack.c.b16 %v1034, %v1030
    %v1335 = vpack.c.b16 %v1035, %v1031
    %v1336 = vpack.c.b16 %v1036, %v1032
    %v1337 = vpack.c.b16 %v1041, %v1037
    %v1338 = vpack.c.b16 %v1042, %v1038
    %v1339 = vpack.c.b16 %v1043, %v1039
    %v1340 = vpack.c.b16 %v1044, %v1040
    %v1341 = vpack.c.b16 %v1049, %v1045
    %v1342 = vpack.c.b16 %v1050, %v1046
    %v1343 = vpack.c.b16 %v1051, %v1047
    %v1344 = vpack.c.b16 %v1052, %v1048
    %v1345 = vpack.c.b16 %v1057, %v1053
    %v1346 = vpack.c.b16 %v1058, %v1054
    %v1347 = vpack.c.b16 %v1059, %v1055
    %v1348 = vpack.c.b16 %v1060, %v1056
    %v1349 = vpack.c.b16 %v1065, %v1061
    %v1350 = vpack.c.b16 %v1066, %v1062
    %v1351 = vpack.c.b16 %v1067, %v1063
    %v1352 = vpack.c.b16 %v1068, %v1064
    %v1353 = vpack.c.b16 %v1073, %v1069
    %v1354 = vpack.c.b16 %v1074, %v1070
    %v1355 = vpack.c.b16 %v1075, %v1071
    %v1356 = vpack.c.b16 %v1076, %v1072
    %v1357 = vpack.c.b16 %v1081, %v1077
    %v1358 = vpack.c.b16 %v1082, %v1078
    %v1359 = vpack.c.b16 %v1083, %v1079
    %v1360 = vpack.c.b16 %v1084, %v1080
    %v1361 = vpack.c.b16 %v1089, %v1085
    %v1362 = vpack.c.b16 %v1090, %v1086
    %v1363 = vpack.c.b16 %v1091, %v1087
    %v1364 = vpack.c.b16 %v1092, %v1088
    %v1365 = vpack.c.b16 %v1097, %v1093
    %v1366 = vpack.c.b16 %v1098, %v1094
    %v1367 = vpack.c.b16 %v1099, %v1095
    %v1368 = vpack.c.b16 %v1100, %v1096
    %v1369 = vpack.c.b16 %v1105, %v1101
    %v1370 = vpack.c.b16 %v1106, %v1102
    %v1371 = vpack.c.b16 %v1107, %v1103
    %v1372 = vpack.c.b16 %v1108, %v1104
    %v1373 = vpack.c.b16 %v1113, %v1109
    %v1374 = vpack.c.b16 %v1114, %v1110
    %v1375 = vpack.c.b16 %v1115, %v1111
    %v1376 = vpack.c.b16 %v1116, %v1112
    %v1377 = vpack.c.b16 %v1121, %v1117
    %v1378 = vpack.c.b16 %v1122, %v1118
    %v1379 = vpack.c.b16 %v1123, %v1119
    %v1380 = vpack.c.b16 %v1124, %v1120
    %1637 = vmatprep.subr.bf16.mxu0 %v1154
    %1638 = vmatpush1.bf16.msra.mxu0 %v1153
    %1639 = vmatprep.subr.bf16.mxu0 %v1150
    %1640 = vmatpush1.bf16.msra.mxu0 %v1149
    %1641 = vmatprep.subr.bf16.mxu0 %v1146
    %1642 = vmatpush1.bf16.msra.mxu0 %v1145
    %1643 = vmatprep.subr.bf16.mxu0 %v1142
    %1644 = vmatpush1.bf16.msra.mxu0 %v1141
    %1645 = vmatprep.subr.bf16.mxu0 %v1138
    %1646 = vmatpush1.bf16.msra.mxu0 %v1137
    %1647 = vmatprep.subr.bf16.mxu0 %v1134
    %1648 = vmatpush1.bf16.msra.mxu0 %v1133
    %1649 = vmatprep.subr.bf16.mxu0 %v1130
    %1650 = vmatpush1.bf16.msra.mxu0 %v1129
    %1651 = vmatprep.subr.bf16.mxu0 %v1126
    %1652 = vmatpush1.bf16.msra.mxu0 %v1125
    %1653 = vmatprep.subr.bf16.mxu0 %v1186
    %1654 = vmatpush2.bf16.msra.mxu0 %v1185
    %1655 = vmatprep.subr.bf16.mxu0 %v1182
    %1656 = vmatpush2.bf16.msra.mxu0 %v1181
    %1657 = vmatprep.subr.bf16.mxu0 %v1178
    %1658 = vmatpush2.bf16.msra.mxu0 %v1177
    %1659 = vmatprep.subr.bf16.mxu0 %v1174
    %1660 = vmatpush2.bf16.msra.mxu0 %v1173
    %1661 = vmatprep.subr.bf16.mxu0 %v1170
    %1662 = vmatpush2.bf16.msra.mxu0 %v1169
    %1663 = vmatprep.subr.bf16.mxu0 %v1166
    %1664 = vmatpush2.bf16.msra.mxu0 %v1165
    %1665 = vmatprep.subr.bf16.mxu0 %v1162
    %1666 = vmatpush2.bf16.msra.mxu0 %v1161
    %1667 = vmatprep.subr.bf16.mxu0 %v1158
    %1668 = vmatpush2.bf16.msra.mxu0 %v1157
    %1669 = vmatprep.mubr.bf16.mxu0 %v72
    %1670 = vmatmul.mubr.bf16.gmra.mxu0 %v71
    %v1671 = vpop.f32.mrf.mxu0
    %v1672 = vadd.f32 %v340, %v1671
    %v1673 = vpop.f32.mrf.mxu0
    %v1674 = vadd.f32 %v344, %v1673
    %v1675 = vpop.f32.mrf.mxu0
    %v1676 = vpop.f32.mrf.mxu0
    %1677 = vdwg.mxu0
    %1678 = vmatprep.subr.bf16.mxu0 %v1218
    %1679 = vmatpush1.bf16.msra.mxu0 %v1217
    %1680 = vmatprep.subr.bf16.mxu0 %v1214
    %1681 = vmatpush1.bf16.msra.mxu0 %v1213
    %1682 = vmatprep.subr.bf16.mxu0 %v1210
    %1683 = vmatpush1.bf16.msra.mxu0 %v1209
    %1684 = vmatprep.subr.bf16.mxu0 %v1206
    %1685 = vmatpush1.bf16.msra.mxu0 %v1205
    %1686 = vmatprep.subr.bf16.mxu0 %v1202
    %1687 = vmatpush1.bf16.msra.mxu0 %v1201
    %1688 = vmatprep.subr.bf16.mxu0 %v1198
    %1689 = vmatpush1.bf16.msra.mxu0 %v1197
    %1690 = vmatprep.subr.bf16.mxu0 %v1194
    %1691 = vmatpush1.bf16.msra.mxu0 %v1193
    %1692 = vmatprep.subr.bf16.mxu0 %v1190
    %1693 = vmatpush1.bf16.msra.mxu0 %v1189
    %1694 = vmatprep.subr.bf16.mxu0 %v1250
    %1695 = vmatpush2.bf16.msra.mxu0 %v1249
    %1696 = vmatprep.subr.bf16.mxu0 %v1246
    %1697 = vmatpush2.bf16.msra.mxu0 %v1245
    %1698 = vmatprep.subr.bf16.mxu0 %v1242
    %1699 = vmatpush2.bf16.msra.mxu0 %v1241
    %1700 = vmatprep.subr.bf16.mxu0 %v1238
    %1701 = vmatpush2.bf16.msra.mxu0 %v1237
    %1702 = vmatprep.subr.bf16.mxu0 %v1234
    %1703 = vmatpush2.bf16.msra.mxu0 %v1233
    %1704 = vmatprep.subr.bf16.mxu0 %v1230
    %1705 = vmatpush2.bf16.msra.mxu0 %v1229
    %1706 = vmatprep.subr.bf16.mxu0 %v1226
    %1707 = vmatpush2.bf16.msra.mxu0 %v1225
    %1708 = vmatprep.subr.bf16.mxu0 %v1222
    %1709 = vmatpush2.bf16.msra.mxu0 %v1221
    %1710 = vmatprep.mubr.bf16.mxu0 %v74
    %1711 = vmatmul.mubr.bf16.gmra.mxu0 %v73
    %v1712 = vpop.f32.mrf.mxu0
    %v1713 = vadd.f32 %v1672, %v1712
    %v1714 = vpop.f32.mrf.mxu0
    %v1715 = vadd.f32 %v1674, %v1714
    %v1716 = vpop.f32.mrf.mxu0
    %v1717 = vpop.f32.mrf.mxu0
    %1718 = vdwg.mxu0
    %1719 = vmatprep.subr.bf16.mxu0 %v1282
    %1720 = vmatpush1.bf16.msra.mxu0 %v1281
    %1721 = vmatprep.subr.bf16.mxu0 %v1278
    %1722 = vmatpush1.bf16.msra.mxu0 %v1277
    %1723 = vmatprep.subr.bf16.mxu0 %v1274
    %1724 = vmatpush1.bf16.msra.mxu0 %v1273
    %1725 = vmatprep.subr.bf16.mxu0 %v1270
    %1726 = vmatpush1.bf16.msra.mxu0 %v1269
    %1727 = vmatprep.subr.bf16.mxu0 %v1266
    %1728 = vmatpush1.bf16.msra.mxu0 %v1265
    %1729 = vmatprep.subr.bf16.mxu0 %v1262
    %1730 = vmatpush1.bf16.msra.mxu0 %v1261
    %1731 = vmatprep.subr.bf16.mxu0 %v1258
    %1732 = vmatpush1.bf16.msra.mxu0 %v1257
    %1733 = vmatprep.subr.bf16.mxu0 %v1254
    %1734 = vmatpush1.bf16.msra.mxu0 %v1253
    %1735 = vmatprep.subr.bf16.mxu0 %v1314
    %1736 = vmatpush2.bf16.msra.mxu0 %v1313
    %1737 = vmatprep.subr.bf16.mxu0 %v1310
    %1738 = vmatpush2.bf16.msra.mxu0 %v1309
    %1739 = vmatprep.subr.bf16.mxu0 %v1306
    %1740 = vmatpush2.bf16.msra.mxu0 %v1305
    %1741 = vmatprep.subr.bf16.mxu0 %v1302
    %1742 = vmatpush2.bf16.msra.mxu0 %v1301
    %1743 = vmatprep.subr.bf16.mxu0 %v1298
    %1744 = vmatpush2.bf16.msra.mxu0 %v1297
    %1745 = vmatprep.subr.bf16.mxu0 %v1294
    %1746 = vmatpush2.bf16.msra.mxu0 %v1293
    %1747 = vmatprep.subr.bf16.mxu0 %v1290
    %1748 = vmatpush2.bf16.msra.mxu0 %v1289
    %1749 = vmatprep.subr.bf16.mxu0 %v1286
    %1750 = vmatpush2.bf16.msra.mxu0 %v1285
    %1751 = vmatprep.mubr.bf16.mxu0 %v76
    %1752 = vmatmul.mubr.bf16.gmra.mxu0 %v75
    %v1753 = vpop.f32.mrf.mxu0
    %v1754 = vadd.f32 %v1713, %v1753
    %v1755 = vpop.f32.mrf.mxu0
    %v1756 = vadd.f32 %v1715, %v1755
    %v1757 = vpop.f32.mrf.mxu0
    %v1758 = vpop.f32.mrf.mxu0
    %1759 = vdwg.mxu0
    %1760 = vmatprep.subr.bf16.mxu0 %v1346
    %1761 = vmatpush1.bf16.msra.mxu0 %v1345
    %1762 = vmatprep.subr.bf16.mxu0 %v1342
    %1763 = vmatpush1.bf16.msra.mxu0 %v1341
    %1764 = vmatprep.subr.bf16.mxu0 %v1338
    %1765 = vmatpush1.bf16.msra.mxu0 %v1337
    %1766 = vmatprep.subr.bf16.mxu0 %v1334
    %1767 = vmatpush1.bf16.msra.mxu0 %v1333
    %1768 = vmatprep.subr.bf16.mxu0 %v1330
    %1769 = vmatpush1.bf16.msra.mxu0 %v1329
    %1770 = vmatprep.subr.bf16.mxu0 %v1326
    %1771 = vmatpush1.bf16.msra.mxu0 %v1325
    %1772 = vmatprep.subr.bf16.mxu0 %v1322
    %1773 = vmatpush1.bf16.msra.mxu0 %v1321
    %1774 = vmatprep.subr.bf16.mxu0 %v1318
    %1775 = vmatpush1.bf16.msra.mxu0 %v1317
    %1776 = vmatprep.subr.bf16.mxu0 %v1378
    %1777 = vmatpush2.bf16.msra.mxu0 %v1377
    %1778 = vmatprep.subr.bf16.mxu0 %v1374
    %1779 = vmatpush2.bf16.msra.mxu0 %v1373
    %1780 = vmatprep.subr.bf16.mxu0 %v1370
    %1781 = vmatpush2.bf16.msra.mxu0 %v1369
    %1782 = vmatprep.subr.bf16.mxu0 %v1366
    %1783 = vmatpush2.bf16.msra.mxu0 %v1365
    %1784 = vmatprep.subr.bf16.mxu0 %v1362
    %1785 = vmatpush2.bf16.msra.mxu0 %v1361
    %1786 = vmatprep.subr.bf16.mxu0 %v1358
    %1787 = vmatpush2.bf16.msra.mxu0 %v1357
    %1788 = vmatprep.subr.bf16.mxu0 %v1354
    %1789 = vmatpush2.bf16.msra.mxu0 %v1353
    %1790 = vmatprep.subr.bf16.mxu0 %v1350
    %1791 = vmatpush2.bf16.msra.mxu0 %v1349
    %1792 = vmatprep.mubr.bf16.mxu0 %v78
    %1793 = vmatmul.mubr.bf16.gmra.mxu0 %v77
    %v1794 = vpop.f32.mrf.mxu0
    %v1795 = vadd.f32 %v1754, %v1794
    %v1796 = vpop.f32.mrf.mxu0
    %v1797 = vadd.f32 %v1756, %v1796
    %v1798 = vpop.f32.mrf.mxu0
    %v1799 = vpop.f32.mrf.mxu0
    %1800 = vdwg.mxu0
    %1801 = vmatprep.subr.bf16.mxu0 %v1156
    %1802 = vmatpush1.bf16.msra.mxu0 %v1155
    %1803 = vmatprep.subr.bf16.mxu0 %v1152
    %1804 = vmatpush1.bf16.msra.mxu0 %v1151
    %1805 = vmatprep.subr.bf16.mxu0 %v1148
    %1806 = vmatpush1.bf16.msra.mxu0 %v1147
    %1807 = vmatprep.subr.bf16.mxu0 %v1144
    %1808 = vmatpush1.bf16.msra.mxu0 %v1143
    %1809 = vmatprep.subr.bf16.mxu0 %v1140
    %1810 = vmatpush1.bf16.msra.mxu0 %v1139
    %1811 = vmatprep.subr.bf16.mxu0 %v1136
    %1812 = vmatpush1.bf16.msra.mxu0 %v1135
    %1813 = vmatprep.subr.bf16.mxu0 %v1132
    %1814 = vmatpush1.bf16.msra.mxu0 %v1131
    %1815 = vmatprep.subr.bf16.mxu0 %v1128
    %1816 = vmatpush1.bf16.msra.mxu0 %v1127
    %1817 = vmatprep.subr.bf16.mxu0 %v1188
    %1818 = vmatpush2.bf16.msra.mxu0 %v1187
    %1819 = vmatprep.subr.bf16.mxu0 %v1184
    %1820 = vmatpush2.bf16.msra.mxu0 %v1183
    %1821 = vmatprep.subr.bf16.mxu0 %v1180
    %1822 = vmatpush2.bf16.msra.mxu0 %v1179
    %1823 = vmatprep.subr.bf16.mxu0 %v1176
    %1824 = vmatpush2.bf16.msra.mxu0 %v1175
    %1825 = vmatprep.subr.bf16.mxu0 %v1172
    %1826 = vmatpush2.bf16.msra.mxu0 %v1171
    %1827 = vmatprep.subr.bf16.mxu0 %v1168
    %1828 = vmatpush2.bf16.msra.mxu0 %v1167
    %1829 = vmatprep.subr.bf16.mxu0 %v1164
    %1830 = vmatpush2.bf16.msra.mxu0 %v1163
    %1831 = vmatprep.subr.bf16.mxu0 %v1160
    %1832 = vmatpush2.bf16.msra.mxu0 %v1159
    %1833 = vmatprep.mubr.bf16.mxu0 %v72
    %1834 = vmatmul.mubr.bf16.gmra.mxu0 %v71
    %v1835 = vpop.f32.mrf.mxu0
    %v1836 = vadd.f32 %v348, %v1835
    %v1837 = vpop.f32.mrf.mxu0
    %v1838 = vadd.f32 %v352, %v1837
    %v1839 = vpop.f32.mrf.mxu0
    %v1840 = vpop.f32.mrf.mxu0
    %1841 = vdwg.mxu0
    %1842 = vmatprep.subr.bf16.mxu0 %v1220
    %1843 = vmatpush1.bf16.msra.mxu0 %v1219
    %1844 = vmatprep.subr.bf16.mxu0 %v1216
    %1845 = vmatpush1.bf16.msra.mxu0 %v1215
    %1846 = vmatprep.subr.bf16.mxu0 %v1212
    %1847 = vmatpush1.bf16.msra.mxu0 %v1211
    %1848 = vmatprep.subr.bf16.mxu0 %v1208
    %1849 = vmatpush1.bf16.msra.mxu0 %v1207
    %1850 = vmatprep.subr.bf16.mxu0 %v1204
    %1851 = vmatpush1.bf16.msra.mxu0 %v1203
    %1852 = vmatprep.subr.bf16.mxu0 %v1200
    %1853 = vmatpush1.bf16.msra.mxu0 %v1199
    %1854 = vmatprep.subr.bf16.mxu0 %v1196
    %1855 = vmatpush1.bf16.msra.mxu0 %v1195
    %1856 = vmatprep.subr.bf16.mxu0 %v1192
    %1857 = vmatpush1.bf16.msra.mxu0 %v1191
    %1858 = vmatprep.subr.bf16.mxu0 %v1252
    %1859 = vmatpush2.bf16.msra.mxu0 %v1251
    %1860 = vmatprep.subr.bf16.mxu0 %v1248
    %1861 = vmatpush2.bf16.msra.mxu0 %v1247
    %1862 = vmatprep.subr.bf16.mxu0 %v1244
    %1863 = vmatpush2.bf16.msra.mxu0 %v1243
    %1864 = vmatprep.subr.bf16.mxu0 %v1240
    %1865 = vmatpush2.bf16.msra.mxu0 %v1239
    %1866 = vmatprep.subr.bf16.mxu0 %v1236
    %1867 = vmatpush2.bf16.msra.mxu0 %v1235
    %1868 = vmatprep.subr.bf16.mxu0 %v1232
    %1869 = vmatpush2.bf16.msra.mxu0 %v1231
    %1870 = vmatprep.subr.bf16.mxu0 %v1228
    %1871 = vmatpush2.bf16.msra.mxu0 %v1227
    %1872 = vmatprep.subr.bf16.mxu0 %v1224
    %1873 = vmatpush2.bf16.msra.mxu0 %v1223
    %1874 = vmatprep.mubr.bf16.mxu0 %v74
    %1875 = vmatmul.mubr.bf16.gmra.mxu0 %v73
    %v1876 = vpop.f32.mrf.mxu0
    %v1877 = vadd.f32 %v1836, %v1876
    %v1878 = vpop.f32.mrf.mxu0
    %v1879 = vadd.f32 %v1838, %v1878
    %v1880 = vpop.f32.mrf.mxu0
    %v1881 = vpop.f32.mrf.mxu0
    %1882 = vdwg.mxu0
    %1883 = vmatprep.subr.bf16.mxu0 %v1284
    %1884 = vmatpush1.bf16.msra.mxu0 %v1283
    %1885 = vmatprep.subr.bf16.mxu0 %v1280
    %1886 = vmatpush1.bf16.msra.mxu0 %v1279
    %1887 = vmatprep.subr.bf16.mxu0 %v1276
    %1888 = vmatpush1.bf16.msra.mxu0 %v1275
    %1889 = vmatprep.subr.bf16.mxu0 %v1272
    %1890 = vmatpush1.bf16.msra.mxu0 %v1271
    %1891 = vmatprep.subr.bf16.mxu0 %v1268
    %1892 = vmatpush1.bf16.msra.mxu0 %v1267
    %1893 = vmatprep.subr.bf16.mxu0 %v1264
    %1894 = vmatpush1.bf16.msra.mxu0 %v1263
    %1895 = vmatprep.subr.bf16.mxu0 %v1260
    %1896 = vmatpush1.bf16.msra.mxu0 %v1259
    %1897 = vmatprep.subr.bf16.mxu0 %v1256
    %1898 = vmatpush1.bf16.msra.mxu0 %v1255
    %1899 = vmatprep.subr.bf16.mxu0 %v1316
    %1900 = vmatpush2.bf16.msra.mxu0 %v1315
    %1901 = vmatprep.subr.bf16.mxu0 %v1312
    %1902 = vmatpush2.bf16.msra.mxu0 %v1311
    %1903 = vmatprep.subr.bf16.mxu0 %v1308
    %1904 = vmatpush2.bf16.msra.mxu0 %v1307
    %1905 = vmatprep.subr.bf16.mxu0 %v1304
    %1906 = vmatpush2.bf16.msra.mxu0 %v1303
    %1907 = vmatprep.subr.bf16.mxu0 %v1300
    %1908 = vmatpush2.bf16.msra.mxu0 %v1299
    %1909 = vmatprep.subr.bf16.mxu0 %v1296
    %1910 = vmatpush2.bf16.msra.mxu0 %v1295
    %1911 = vmatprep.subr.bf16.mxu0 %v1292
    %1912 = vmatpush2.bf16.msra.mxu0 %v1291
    %1913 = vmatprep.subr.bf16.mxu0 %v1288
    %1914 = vmatpush2.bf16.msra.mxu0 %v1287
    %1915 = vmatprep.mubr.bf16.mxu0 %v76
    %1916 = vmatmul.mubr.bf16.gmra.mxu0 %v75
    %v1917 = vpop.f32.mrf.mxu0
    %v1918 = vadd.f32 %v1877, %v1917
    %v1919 = vpop.f32.mrf.mxu0
    %v1920 = vadd.f32 %v1879, %v1919
    %v1921 = vpop.f32.mrf.mxu0
    %v1922 = vpop.f32.mrf.mxu0
    %1923 = vdwg.mxu0
    %1924 = vmatprep.subr.bf16.mxu0 %v1348
    %1925 = vmatpush1.bf16.msra.mxu0 %v1347
    %1926 = vmatprep.subr.bf16.mxu0 %v1344
    %1927 = vmatpush1.bf16.msra.mxu0 %v1343
    %1928 = vmatprep.subr.bf16.mxu0 %v1340
    %1929 = vmatpush1.bf16.msra.mxu0 %v1339
    %1930 = vmatprep.subr.bf16.mxu0 %v1336
    %1931 = vmatpush1.bf16.msra.mxu0 %v1335
    %1932 = vmatprep.subr.bf16.mxu0 %v1332
    %1933 = vmatpush1.bf16.msra.mxu0 %v1331
    %1934 = vmatprep.subr.bf16.mxu0 %v1328
    %1935 = vmatpush1.bf16.msra.mxu0 %v1327
    %1936 = vmatprep.subr.bf16.mxu0 %v1324
    %1937 = vmatpush1.bf16.msra.mxu0 %v1323
    %1938 = vmatprep.subr.bf16.mxu0 %v1320
    %1939 = vmatpush1.bf16.msra.mxu0 %v1319
    %1940 = vmatprep.subr.bf16.mxu0 %v1380
    %1941 = vmatpush2.bf16.msra.mxu0 %v1379
    %1942 = vmatprep.subr.bf16.mxu0 %v1376
    %1943 = vmatpush2.bf16.msra.mxu0 %v1375
    %1944 = vmatprep.subr.bf16.mxu0 %v1372
    %1945 = vmatpush2.bf16.msra.mxu0 %v1371
    %1946 = vmatprep.subr.bf16.mxu0 %v1368
    %1947 = vmatpush2.bf16.msra.mxu0 %v1367
    %1948 = vmatprep.subr.bf16.mxu0 %v1364
    %1949 = vmatpush2.bf16.msra.mxu0 %v1363
    %1950 = vmatprep.subr.bf16.mxu0 %v1360
    %1951 = vmatpush2.bf16.msra.mxu0 %v1359
    %1952 = vmatprep.subr.bf16.mxu0 %v1356
    %1953 = vmatpush2.bf16.msra.mxu0 %v1355
    %1954 = vmatprep.subr.bf16.mxu0 %v1352
    %1955 = vmatpush2.bf16.msra.mxu0 %v1351
    %1956 = vmatprep.mubr.bf16.mxu0 %v78
    %1957 = vmatmul.mubr.bf16.gmra.mxu0 %v77
    %v1958 = vpop.f32.mrf.mxu0
    %v1959 = vadd.f32 %v1918, %v1958
    %v1960 = vpop.f32.mrf.mxu0
    %v1961 = vadd.f32 %v1920, %v1960
    %v1962 = vpop.f32.mrf.mxu0
    %v1963 = vpop.f32.mrf.mxu0
    %1964 = vdwg.mxu0
    %v1965 = vmax.f32 %v1795, 0.0
    %v1966 = vmax.f32 %v1797, 0.0
    %v1967 = vmax.f32 %v1959, 0.0
    %v1968 = vmax.f32 %v1961, 0.0
    %v1969 = vpack.c.bf16 %v1965, %v1965
    %v1970 = vpack.c.bf16 %v1966, %v1966
    %v1971 = vpack.c.bf16 %v1967, %v1967
    %v1972 = vpack.c.bf16 %v1968, %v1968
    %v1973 = vld [vmem:[%s2] sm:$0xff]
    %v1974 = vld [vmem:[%s2 + $0x8] sm:$0xff]
    %v1975 = vld [vmem:[%s2 + $0x10] sm:$0xff]
    %v1976 = vld [vmem:[%s2 + $0x18] sm:$0xff]
    %v1977 = vld [vmem:[%s2 + $0x20] sm:$0xff]
    %v1978 = vld [vmem:[%s2 + $0x28] sm:$0xff]
    %v1979 = vld [vmem:[%s2 + $0x30] sm:$0xff]
    %v1980 = vld [vmem:[%s2 + $0x38] sm:$0xff]
    %v1981 = vld [vmem:[%s2 + $0x40] sm:$0xff]
    %v1982 = vld [vmem:[%s2 + $0x48] sm:$0xff]
    %v1983 = vld [vmem:[%s2 + $0x50] sm:$0xff]
    %v1984 = vld [vmem:[%s2 + $0x58] sm:$0xff]
    %v1985 = vld [vmem:[%s2 + $0x60] sm:$0xff]
    %v1986 = vld [vmem:[%s2 + $0x68] sm:$0xff]
    %v1987 = vld [vmem:[%s2 + $0x70] sm:$0xff]
    %v1988 = vld [vmem:[%s2 + $0x78] sm:$0xff]
    %v1989 = vld [vmem:[%s2 + $0x80] sm:$0xff]
    %v1990 = vld [vmem:[%s2 + $0x88] sm:$0xff]
    %v1991 = vld [vmem:[%s2 + $0x90] sm:$0xff]
    %v1992 = vld [vmem:[%s2 + $0x98] sm:$0xff]
    %v1993 = vld [vmem:[%s2 + $0xa0] sm:$0xff]
    %v1994 = vld [vmem:[%s2 + $0xa8] sm:$0xff]
    %v1995 = vld [vmem:[%s2 + $0xb0] sm:$0xff]
    %v1996 = vld [vmem:[%s2 + $0xb8] sm:$0xff]
    %v1997 = vld [vmem:[%s2 + $0xc0] sm:$0xff]
    %v1998 = vld [vmem:[%s2 + $0xc8] sm:$0xff]
    %v1999 = vld [vmem:[%s2 + $0xd0] sm:$0xff]
    %v2000 = vld [vmem:[%s2 + $0xd8] sm:$0xff]
    %v2001 = vld [vmem:[%s2 + $0xe0] sm:$0xff]
    %v2002 = vld [vmem:[%s2 + $0xe8] sm:$0xff]
    %v2003 = vld [vmem:[%s2 + $0xf0] sm:$0xff]
    %v2004 = vld [vmem:[%s2 + $0xf8] sm:$0xff]
    %v2005 = vld [vmem:[%s2 + $0x100] sm:$0xff]
    %v2006 = vld [vmem:[%s2 + $0x108] sm:$0xff]
    %v2007 = vld [vmem:[%s2 + $0x110] sm:$0xff]
    %v2008 = vld [vmem:[%s2 + $0x118] sm:$0xff]
    %v2009 = vld [vmem:[%s2 + $0x120] sm:$0xff]
    %v2010 = vld [vmem:[%s2 + $0x128] sm:$0xff]
    %v2011 = vld [vmem:[%s2 + $0x130] sm:$0xff]
    %v2012 = vld [vmem:[%s2 + $0x138] sm:$0xff]
    %v2013 = vld [vmem:[%s2 + $0x140] sm:$0xff]
    %v2014 = vld [vmem:[%s2 + $0x148] sm:$0xff]
    %v2015 = vld [vmem:[%s2 + $0x150] sm:$0xff]
    %v2016 = vld [vmem:[%s2 + $0x158] sm:$0xff]
    %v2017 = vld [vmem:[%s2 + $0x160] sm:$0xff]
    %v2018 = vld [vmem:[%s2 + $0x168] sm:$0xff]
    %v2019 = vld [vmem:[%s2 + $0x170] sm:$0xff]
    %v2020 = vld [vmem:[%s2 + $0x178] sm:$0xff]
    %v2021 = vld [vmem:[%s2 + $0x180] sm:$0xff]
    %s2022 = scalar_lea.vmem %s4, 1
    %v2023 = vld [vmem:[%s2022] ss:$8 sm:$0x3]
    %v2025 = vlaneseq
    %v2026 = vshrl.u32 %v2025, 7
    %v2027 = vsub.s32 0, %v2026
    %v2028 = vrot.slane %v2023, %v2027
    %v2029 = vlaneseq
    %v2030 = vshrl.u32 %v2029, 7
    %v2031 = vsub.s32 1, %v2030
    %v2032 = vrot.slane %v2023, %v2031
    %v2084 = vunpack.c.l.b16 %v1973
    %v2085 = vunpack.c.h.b16 %v1973
    %v2086 = vunpack.c.l.b16 %v1974
    %v2087 = vunpack.c.h.b16 %v1974
    %v2088 = vunpack.c.l.b16 %v1975
    %v2089 = vunpack.c.h.b16 %v1975
    %v2090 = vunpack.c.l.b16 %v1976
    %v2091 = vunpack.c.h.b16 %v1976
    %v2092 = vunpack.c.l.b16 %v1977
    %v2093 = vunpack.c.h.b16 %v1977
    %v2094 = vunpack.c.l.b16 %v1978
    %v2095 = vunpack.c.h.b16 %v1978
    %v2096 = vunpack.c.l.b16 %v1979
    %v2097 = vunpack.c.h.b16 %v1979
    %v2098 = vunpack.c.l.b16 %v1980
    %v2099 = vunpack.c.h.b16 %v1980
    %v2100 = vunpack.c.l.b16 %v1981
    %v2101 = vunpack.c.h.b16 %v1981
    %v2102 = vunpack.c.l.b16 %v1982
    %v2103 = vunpack.c.h.b16 %v1982
    %v2104 = vunpack.c.l.b16 %v1983
    %v2105 = vunpack.c.h.b16 %v1983
    %v2106 = vunpack.c.l.b16 %v1984
    %v2107 = vunpack.c.h.b16 %v1984
    %v2108 = vunpack.c.l.b16 %v1985
    %v2109 = vunpack.c.h.b16 %v1985
    %v2110 = vunpack.c.l.b16 %v1986
    %v2111 = vunpack.c.h.b16 %v1986
    %v2112 = vunpack.c.l.b16 %v1987
    %v2113 = vunpack.c.h.b16 %v1987
    %v2114 = vunpack.c.l.b16 %v1988
    %v2115 = vunpack.c.h.b16 %v1988
    %v2116 = vunpack.c.l.b16 %v1989
    %v2117 = vunpack.c.h.b16 %v1989
    %v2118 = vunpack.c.l.b16 %v1990
    %v2119 = vunpack.c.h.b16 %v1990
    %v2120 = vunpack.c.l.b16 %v1991
    %v2121 = vunpack.c.h.b16 %v1991
    %v2122 = vunpack.c.l.b16 %v1992
    %v2123 = vunpack.c.h.b16 %v1992
    %v2124 = vunpack.c.l.b16 %v1993
    %v2125 = vunpack.c.h.b16 %v1993
    %v2126 = vunpack.c.l.b16 %v1994
    %v2127 = vunpack.c.h.b16 %v1994
    %v2128 = vunpack.c.l.b16 %v1995
    %v2129 = vunpack.c.h.b16 %v1995
    %v2130 = vunpack.c.l.b16 %v1996
    %v2131 = vunpack.c.h.b16 %v1996
    %v2132 = vunpack.c.l.b16 %v1997
    %v2133 = vunpack.c.h.b16 %v1997
    %v2134 = vunpack.c.l.b16 %v1998
    %v2135 = vunpack.c.h.b16 %v1998
    %v2136 = vunpack.c.l.b16 %v1999
    %v2137 = vunpack.c.h.b16 %v1999
    %v2138 = vunpack.c.l.b16 %v2000
    %v2139 = vunpack.c.h.b16 %v2000
    %v2140 = vunpack.c.l.b16 %v2001
    %v2141 = vunpack.c.h.b16 %v2001
    %v2142 = vunpack.c.l.b16 %v2002
    %v2143 = vunpack.c.h.b16 %v2002
    %v2144 = vunpack.c.l.b16 %v2003
    %v2145 = vunpack.c.h.b16 %v2003
    %v2146 = vunpack.c.l.b16 %v2004
    %v2147 = vunpack.c.h.b16 %v2004
    %v2148 = vunpack.c.l.b16 %v2005
    %v2149 = vunpack.c.h.b16 %v2005
    %v2150 = vunpack.c.l.b16 %v2006
    %v2151 = vunpack.c.h.b16 %v2006
    %v2152 = vunpack.c.l.b16 %v2007
    %v2153 = vunpack.c.h.b16 %v2007
    %v2154 = vunpack.c.l.b16 %v2008
    %v2155 = vunpack.c.h.b16 %v2008
    %v2156 = vunpack.c.l.b16 %v2009
    %v2157 = vunpack.c.h.b16 %v2009
    %v2158 = vunpack.c.l.b16 %v2010
    %v2159 = vunpack.c.h.b16 %v2010
    %v2160 = vunpack.c.l.b16 %v2011
    %v2161 = vunpack.c.h.b16 %v2011
    %v2162 = vunpack.c.l.b16 %v2012
    %v2163 = vunpack.c.h.b16 %v2012
    %v2164 = vunpack.c.l.b16 %v2013
    %v2165 = vunpack.c.h.b16 %v2013
    %v2166 = vunpack.c.l.b16 %v2014
    %v2167 = vunpack.c.h.b16 %v2014
    %v2168 = vunpack.c.l.b16 %v2015
    %v2169 = vunpack.c.h.b16 %v2015
    %v2170 = vunpack.c.l.b16 %v2016
    %v2171 = vunpack.c.h.b16 %v2016
    %v2172 = vunpack.c.l.b16 %v2017
    %v2173 = vunpack.c.h.b16 %v2017
    %v2174 = vunpack.c.l.b16 %v2018
    %v2175 = vunpack.c.h.b16 %v2018
    %v2176 = vunpack.c.l.b16 %v2019
    %v2177 = vunpack.c.h.b16 %v2019
    %v2178 = vunpack.c.l.b16 %v2020
    %v2179 = vunpack.c.h.b16 %v2020
    %v2180 = vunpack.c.l.b16 %v2021
    %v2181 = vunpack.c.h.b16 %v2021
    %v2182 = vpack.c.b16 %v2086, %v2084
    %v2183 = vpack.c.b16 %v2087, %v2085
    %v2184 = vpack.c.b16 %v2090, %v2088
    %v2185 = vpack.c.b16 %v2091, %v2089
    %v2186 = vpack.c.b16 %v2094, %v2092
    %v2187 = vpack.c.b16 %v2095, %v2093
    %v2188 = vpack.c.b16 %v2098, %v2096
    %v2189 = vpack.c.b16 %v2099, %v2097
    %v2190 = vpack.c.b16 %v2102, %v2100
    %v2191 = vpack.c.b16 %v2103, %v2101
    %v2192 = vpack.c.b16 %v2106, %v2104
    %v2193 = vpack.c.b16 %v2107, %v2105
    %v2194 = vpack.c.b16 %v2110, %v2108
    %v2195 = vpack.c.b16 %v2111, %v2109
    %v2196 = vpack.c.b16 %v2114, %v2112
    %v2197 = vpack.c.b16 %v2115, %v2113
    %v2198 = vpack.c.b16 %v2118, %v2116
    %v2199 = vpack.c.b16 %v2119, %v2117
    %v2200 = vpack.c.b16 %v2122, %v2120
    %v2201 = vpack.c.b16 %v2123, %v2121
    %v2202 = vpack.c.b16 %v2126, %v2124
    %v2203 = vpack.c.b16 %v2127, %v2125
    %v2204 = vpack.c.b16 %v2130, %v2128
    %v2205 = vpack.c.b16 %v2131, %v2129
    %v2206 = vpack.c.b16 %v2134, %v2132
    %v2207 = vpack.c.b16 %v2135, %v2133
    %v2208 = vpack.c.b16 %v2138, %v2136
    %v2209 = vpack.c.b16 %v2139, %v2137
    %v2210 = vpack.c.b16 %v2142, %v2140
    %v2211 = vpack.c.b16 %v2143, %v2141
    %v2212 = vpack.c.b16 %v2146, %v2144
    %v2213 = vpack.c.b16 %v2147, %v2145
    %v2214 = vpack.c.b16 %v2150, %v2148
    %v2215 = vpack.c.b16 %v2151, %v2149
    %v2216 = vpack.c.b16 %v2154, %v2152
    %v2217 = vpack.c.b16 %v2155, %v2153
    %v2218 = vpack.c.b16 %v2158, %v2156
    %v2219 = vpack.c.b16 %v2159, %v2157
    %v2220 = vpack.c.b16 %v2162, %v2160
    %v2221 = vpack.c.b16 %v2163, %v2161
    %v2222 = vpack.c.b16 %v2166, %v2164
    %v2223 = vpack.c.b16 %v2167, %v2165
    %v2224 = vpack.c.b16 %v2170, %v2168
    %v2225 = vpack.c.b16 %v2171, %v2169
    %v2226 = vpack.c.b16 %v2174, %v2172
    %v2227 = vpack.c.b16 %v2175, %v2173
    %v2228 = vpack.c.b16 %v2178, %v2176
    %v2229 = vpack.c.b16 %v2179, %v2177
    %v2230 = vpack.c.b16 %v2180, %v2180
    %v2231 = vpack.c.b16 %v2181, %v2181
    %vm2280 = vcmask 64512
    %v2282 = vsel %vm2280, %v1972, 0
    %vm2284 = vcmask 1043456
    %v2286 = vsel %vm2284, %v2230, 0
    %v2289 = vsel %vm2284, %v2231, 0
    %2291 = vmatprep.subr.bf16.mxu0 %v2197
    %2292 = vmatpush1.bf16.msra.mxu0 %v2196
    %2293 = vmatprep.subr.bf16.mxu0 %v2195
    %2294 = vmatpush1.bf16.msra.mxu0 %v2194
    %2295 = vmatprep.subr.bf16.mxu0 %v2193
    %2296 = vmatpush1.bf16.msra.mxu0 %v2192
    %2297 = vmatprep.subr.bf16.mxu0 %v2191
    %2298 = vmatpush1.bf16.msra.mxu0 %v2190
    %2299 = vmatprep.subr.bf16.mxu0 %v2189
    %2300 = vmatpush1.bf16.msra.mxu0 %v2188
    %2301 = vmatprep.subr.bf16.mxu0 %v2187
    %2302 = vmatpush1.bf16.msra.mxu0 %v2186
    %2303 = vmatprep.subr.bf16.mxu0 %v2185
    %2304 = vmatpush1.bf16.msra.mxu0 %v2184
    %2305 = vmatprep.subr.bf16.mxu0 %v2183
    %2306 = vmatpush1.bf16.msra.mxu0 %v2182
    %2307 = vmatprep.subr.bf16.mxu0 %v2213
    %2308 = vmatpush2.bf16.msra.mxu0 %v2212
    %2309 = vmatprep.subr.bf16.mxu0 %v2211
    %2310 = vmatpush2.bf16.msra.mxu0 %v2210
    %2311 = vmatprep.subr.bf16.mxu0 %v2209
    %2312 = vmatpush2.bf16.msra.mxu0 %v2208
    %2313 = vmatprep.subr.bf16.mxu0 %v2207
    %2314 = vmatpush2.bf16.msra.mxu0 %v2206
    %2315 = vmatprep.subr.bf16.mxu0 %v2205
    %2316 = vmatpush2.bf16.msra.mxu0 %v2204
    %2317 = vmatprep.subr.bf16.mxu0 %v2203
    %2318 = vmatpush2.bf16.msra.mxu0 %v2202
    %2319 = vmatprep.subr.bf16.mxu0 %v2201
    %2320 = vmatpush2.bf16.msra.mxu0 %v2200
    %2321 = vmatprep.subr.bf16.mxu0 %v2199
    %2322 = vmatpush2.bf16.msra.mxu0 %v2198
    %2323 = vmatprep.mubr.bf16.mxu0 %v1970
    %2324 = vmatmul.mubr.bf16.gmra.mxu0 %v1969
    %v2325 = vpop.f32.mrf.mxu0
    %v2326 = vadd.f32 %v2028, %v2325
    %v2327 = vpop.f32.mrf.mxu0
    %v2328 = vadd.f32 %v2032, %v2327
    %v2329 = vpop.f32.mrf.mxu0
    %v2330 = vpop.f32.mrf.mxu0
    %2331 = vdwg.mxu0
    %2332 = vmatprep.subr.bf16.mxu0 %v2229
    %2333 = vmatpush1.bf16.msra.mxu0 %v2228
    %2334 = vmatprep.subr.bf16.mxu0 %v2227
    %2335 = vmatpush1.bf16.msra.mxu0 %v2226
    %2336 = vmatprep.subr.bf16.mxu0 %v2225
    %2337 = vmatpush1.bf16.msra.mxu0 %v2224
    %2338 = vmatprep.subr.bf16.mxu0 %v2223
    %2339 = vmatpush1.bf16.msra.mxu0 %v2222
    %2340 = vmatprep.subr.bf16.mxu0 %v2221
    %2341 = vmatpush1.bf16.msra.mxu0 %v2220
    %2342 = vmatprep.subr.bf16.mxu0 %v2219
    %2343 = vmatpush1.bf16.msra.mxu0 %v2218
    %2344 = vmatprep.subr.bf16.mxu0 %v2217
    %2345 = vmatpush1.bf16.msra.mxu0 %v2216
    %2346 = vmatprep.subr.bf16.mxu0 %v2215
    %2347 = vmatpush1.bf16.msra.mxu0 %v2214
    %2348 = vmatprep.subr.bf16.mxu0 0
    %2349 = vmatpush2.bf16.msra.mxu0 0
    %2350 = vmatprep.subr.bf16.mxu0 0
    %2351 = vmatpush2.bf16.msra.mxu0 0
    %2352 = vmatprep.subr.bf16.mxu0 0
    %2353 = vmatpush2.bf16.msra.mxu0 0
    %2354 = vmatprep.subr.bf16.mxu0 0
    %2355 = vmatpush2.bf16.msra.mxu0 0
    %2356 = vmatprep.subr.bf16.mxu0 0
    %2357 = vmatpush2.bf16.msra.mxu0 0
    %2358 = vmatprep.subr.bf16.mxu0 0
    %2359 = vmatpush2.bf16.msra.mxu0 0
    %2360 = vmatprep.subr.bf16.mxu0 0
    %2361 = vmatpush2.bf16.msra.mxu0 0
    %2362 = vmatprep.subr.bf16.mxu0 %v2289
    %2363 = vmatpush2.bf16.msra.mxu0 %v2286
    %2364 = vmatprep.mubr.bf16.mxu0 %v2282
    %2365 = vmatmul.mubr.bf16.gmra.mxu0 %v1971
    %v2366 = vpop.f32.mrf.mxu0
    %v2367 = vadd.f32 %v2326, %v2366
    %v2368 = vpop.f32.mrf.mxu0
    %v2369 = vadd.f32 %v2328, %v2368
    %v2370 = vpop.f32.mrf.mxu0
    %v2371 = vpop.f32.mrf.mxu0
    %2372 = vdwg.mxu0
    %v2373 = vmax.f32 %v2367, 0.0
    %v2374 = vmax.f32 %v2369, 0.0
    %v2377 = vcombine.low %v2373, %v2374
    %v2379 = vunpack.c.l.s4 1983009808
    %v2380 = vunpack.c.0.s8 %v2379
    %v2381 = vlaneseq
    %v2382 = vshrl.u32 %v2381, 7
    %v2383 = vsub.s32 %v2380, %v2382
    %v2384 = vrot.slane %v2377, %v2383
    %vm2386 = vcmask 1041408
    %vm2387 = vcmask 584706
    %vm2388 = vmor %vm2387, %vm2386
    %2389 = vst.msk [vmem:[%s7] sm:$0xf] %vm2388, %v2384
    %v2390 = vpack.c.bf16 %v2373, %v2373
    %v2391 = vpack.c.bf16 %v2374, %v2374
    %v2392 = vld [vmem:[%s3] sm:$0xf]
    %v2393 = vld [vmem:[%s3 + $0x4] sm:$0xf]
    %v2394 = vld [vmem:[%s3 + $0x8] sm:$0xf]
    %v2395 = vld [vmem:[%s3 + $0xc] sm:$0xf]
    %v2396 = vld [vmem:[%s3 + $0x10] sm:$0xf]
    %v2397 = vld [vmem:[%s3 + $0x14] sm:$0xf]
    %v2398 = vld [vmem:[%s3 + $0x18] sm:$0xf]
    %v2399 = vld [vmem:[%s3 + $0x1c] sm:$0xf]
    %v2400 = vld [vmem:[%s3 + $0x20] sm:$0xf]
    %v2401 = vld [vmem:[%s3 + $0x24] sm:$0xf]
    %v2402 = vld [vmem:[%s3 + $0x28] sm:$0xf]
    %v2403 = vld [vmem:[%s3 + $0x2c] sm:$0xf]
    %v2404 = vld [vmem:[%s3 + $0x30] sm:$0xf]
    %v2405 = vld [vmem:[%s3 + $0x34] sm:$0xf]
    %v2406 = vld [vmem:[%s3 + $0x38] sm:$0xf]
    %v2407 = vld [vmem:[%s3 + $0x3c] sm:$0xf]
    %v2408 = vld [vmem:[%s3 + $0x40] sm:$0xf]
    %v2409 = vld [vmem:[%s3 + $0x44] sm:$0xf]
    %v2410 = vld [vmem:[%s3 + $0x48] sm:$0xf]
    %v2411 = vld [vmem:[%s3 + $0x4c] sm:$0xf]
    %v2412 = vld [vmem:[%s3 + $0x50] sm:$0xf]
    %v2413 = vld [vmem:[%s3 + $0x54] sm:$0xf]
    %v2414 = vld [vmem:[%s3 + $0x58] sm:$0xf]
    %v2415 = vld [vmem:[%s3 + $0x5c] sm:$0xf]
    %v2416 = vld [vmem:[%s3 + $0x60] sm:$0xf]
    %v2417 = vld [vmem:[%s4 + $0x2] ss:$0 sm:$0xff]
    %v2443 = vunpack.c.l.b16 %v2392
    %v2444 = vunpack.c.l.b16 %v2393
    %v2445 = vunpack.c.l.b16 %v2394
    %v2446 = vunpack.c.l.b16 %v2395
    %v2447 = vunpack.c.l.b16 %v2396
    %v2448 = vunpack.c.l.b16 %v2397
    %v2449 = vunpack.c.l.b16 %v2398
    %v2450 = vunpack.c.l.b16 %v2399
    %v2451 = vunpack.c.l.b16 %v2400
    %v2452 = vunpack.c.l.b16 %v2401
    %v2453 = vunpack.c.l.b16 %v2402
    %v2454 = vunpack.c.l.b16 %v2403
    %v2455 = vunpack.c.l.b16 %v2404
    %v2456 = vunpack.c.l.b16 %v2405
    %v2457 = vunpack.c.l.b16 %v2406
    %v2458 = vunpack.c.l.b16 %v2407
    %v2459 = vunpack.c.l.b16 %v2408
    %v2460 = vunpack.c.l.b16 %v2409
    %v2461 = vunpack.c.l.b16 %v2410
    %v2462 = vunpack.c.l.b16 %v2411
    %v2463 = vunpack.c.l.b16 %v2412
    %v2464 = vunpack.c.l.b16 %v2413
    %v2465 = vunpack.c.l.b16 %v2414
    %v2466 = vunpack.c.l.b16 %v2415
    %v2467 = vunpack.c.l.b16 %v2416
    %v2468 = vpack.c.b16 %v2444, %v2443
    %v2469 = vpack.c.b16 %v2446, %v2445
    %v2470 = vpack.c.b16 %v2448, %v2447
    %v2471 = vpack.c.b16 %v2450, %v2449
    %v2472 = vpack.c.b16 %v2452, %v2451
    %v2473 = vpack.c.b16 %v2454, %v2453
    %v2474 = vpack.c.b16 %v2456, %v2455
    %v2475 = vpack.c.b16 %v2458, %v2457
    %v2476 = vpack.c.b16 %v2460, %v2459
    %v2477 = vpack.c.b16 %v2462, %v2461
    %v2478 = vpack.c.b16 %v2464, %v2463
    %v2479 = vpack.c.b16 %v2466, %v2465
    %v2480 = vpack.c.b16 %v2467, %v2467
    %vm2493 = vcmask 588800
    %v2495 = vsel %vm2493, %v2391, 0
    %v2498 = vsel %vm2284, %v2480, 0
    %2500 = vmatprep.subr.bf16.mxu0 0
    %2501 = vmatpush1.bf16.msra.mxu0 %v2475
    %2502 = vmatprep.subr.bf16.mxu0 0
    %2503 = vmatpush1.bf16.msra.mxu0 %v2474
    %2504 = vmatprep.subr.bf16.mxu0 0
    %2505 = vmatpush1.bf16.msra.mxu0 %v2473
    %2506 = vmatprep.subr.bf16.mxu0 0
    %2507 = vmatpush1.bf16.msra.mxu0 %v2472
    %2508 = vmatprep.subr.bf16.mxu0 0
    %2509 = vmatpush1.bf16.msra.mxu0 %v2471
    %2510 = vmatprep.subr.bf16.mxu0 0
    %2511 = vmatpush1.bf16.msra.mxu0 %v2470
    %2512 = vmatprep.subr.bf16.mxu0 0
    %2513 = vmatpush1.bf16.msra.mxu0 %v2469
    %2514 = vmatprep.subr.bf16.mxu0 0
    %2515 = vmatpush1.bf16.msra.mxu0 %v2468
    %2516 = vmatprep.subr.bf16.mxu0 0
    %2517 = vmatpush2.bf16.msra.mxu0 0
    %2518 = vmatprep.subr.bf16.mxu0 0
    %2519 = vmatpush2.bf16.msra.mxu0 0
    %2520 = vmatprep.subr.bf16.mxu0 0
    %2521 = vmatpush2.bf16.msra.mxu0 0
    %2522 = vmatprep.subr.bf16.mxu0 0
    %2523 = vmatpush2.bf16.msra.mxu0 %v2498
    %2524 = vmatprep.subr.bf16.mxu0 0
    %2525 = vmatpush2.bf16.msra.mxu0 %v2479
    %2526 = vmatprep.subr.bf16.mxu0 0
    %2527 = vmatpush2.bf16.msra.mxu0 %v2478
    %2528 = vmatprep.subr.bf16.mxu0 0
    %2529 = vmatpush2.bf16.msra.mxu0 %v2477
    %2530 = vmatprep.subr.bf16.mxu0 0
    %2531 = vmatpush2.bf16.msra.mxu0 %v2476
    %2532 = vmatprep.mubr.bf16.mxu0 %v2495
    %2533 = vmatmul.mubr.bf16.gmra.mxu0 %v2390
    %v2534 = vpop.f32.mrf.mxu0
    %v2535 = vadd.f32 %v2417, %v2534
    %v2536 = vpop.f32.mrf.mxu0
    %v2537 = vpop.f32.mrf.mxu0
    %v2538 = vpop.f32.mrf.mxu0
    %2539 = vdwg.mxu0
    %vm2540 = vcmask 254976
    %v2541 = vsel %vm2540, %v2535, 0.0
    %2542 = vadd.xlane.f32.xlu0 %v2541
    %v2543 = vpop.xlane.xlu0 %2542
    %v2544 = vrcp.pop 32.0
    %v2545 = vmul.f32 %v2543, %v2544
    %v2546 = vsub.f32 %v2535, %v2545
    %v2547 = vmul.f32 %v2546, %v2546
    %v2548 = vsel %vm2540, %v2547, 0.0
    %2549 = vadd.xlane.f32.xlu0 %v2548
    %v2550 = vpop.xlane.xlu0 %2549
    %v2551 = vmul.f32 %v2550, %v2544
    %v2552 = vadd.f32 %v2551, 1e-05
    %v2553 = vrsqrt.pop %v2552
    %v2554 = vmul.f32 %v2546, %v2553
    %v2555 = vld [vmem:[%s4 + $0x3] ss:$0 sm:$0xff]
    %v2556 = vmul.f32 %v2554, %v2555
    %v2557 = vld [vmem:[%s4 + $0x4] ss:$0 sm:$0xff]
    %v2558 = vadd.f32 %v2556, %v2557
    %v2559 = vtanh.pop %v2558
    %2560 = vst.msk [vmem:[#allocation2] sm:$0x3] %vm2540, %v2559
    %v2561 = vpack.c.bf16 %v2559, %v2559
    %v2562 = vld [vmem:[%s3 + $0x64] sm:$0xf]
    %v2563 = vld [vmem:[%s3 + $0x68] sm:$0xf]
    %v2564 = vld [vmem:[%s3 + $0x6c] sm:$0xf]
    %v2565 = vld [vmem:[%s3 + $0x70] sm:$0xf]
    %v2566 = vld [vmem:[%s4 + $0x5] ss:$0 sm:$0xff]
    %v2571 = vunpack.c.l.b16 %v2562
    %v2572 = vunpack.c.l.b16 %v2563
    %v2573 = vunpack.c.l.b16 %v2564
    %v2574 = vunpack.c.l.b16 %v2565
    %v2575 = vpack.c.b16 %v2572, %v2571
    %v2576 = vpack.c.b16 %v2574, %v2573
    %vm2579 = vcmask 261120
    %v2581 = vsel %vm2579, %v2561, 0
    %2583 = vmatprep.subr.bf16.mxu0 0
    %2584 = vmatpush1.bf16.msra.mxu0 0
    %2585 = vmatprep.subr.bf16.mxu0 0
    %2586 = vmatpush1.bf16.msra.mxu0 0
    %2587 = vmatprep.subr.bf16.mxu0 0
    %2588 = vmatpush1.bf16.msra.mxu0 0
    %2589 = vmatprep.subr.bf16.mxu0 0
    %2590 = vmatpush1.bf16.msra.mxu0 0
    %2591 = vmatprep.subr.bf16.mxu0 0
    %2592 = vmatpush1.bf16.msra.mxu0 0
    %2593 = vmatprep.subr.bf16.mxu0 0
    %2594 = vmatpush1.bf16.msra.mxu0 0
    %2595 = vmatprep.subr.bf16.mxu0 0
    %2596 = vmatpush1.bf16.msra.mxu0 %v2576
    %2597 = vmatprep.subr.bf16.mxu0 0
    %2598 = vmatpush1.bf16.msra.mxu0 %v2575
    %2599 = vmatprep.subr.bf16.mxu0 0
    %2600 = vmatpush2.bf16.msra.mxu0 0
    %2601 = vmatprep.subr.bf16.mxu0 0
    %2602 = vmatpush2.bf16.msra.mxu0 0
    %2603 = vmatprep.subr.bf16.mxu0 0
    %2604 = vmatpush2.bf16.msra.mxu0 0
    %2605 = vmatprep.subr.bf16.mxu0 0
    %2606 = vmatpush2.bf16.msra.mxu0 0
    %2607 = vmatprep.subr.bf16.mxu0 0
    %2608 = vmatpush2.bf16.msra.mxu0 0
    %2609 = vmatprep.subr.bf16.mxu0 0
    %2610 = vmatpush2.bf16.msra.mxu0 0
    %2611 = vmatprep.subr.bf16.mxu0 0
    %2612 = vmatpush2.bf16.msra.mxu0 0
    %2613 = vmatprep.subr.bf16.mxu0 0
    %2614 = vmatpush2.bf16.msra.mxu0 0
    %2615 = vmatprep.mubr.bf16.mxu0 0
    %2616 = vmatmul.mubr.bf16.gmra.mxu0 %v2581
    %v2617 = vpop.f32.mrf.mxu0
    %v2618 = vadd.f32 %v2566, %v2617
    %v2619 = vpop.f32.mrf.mxu0
    %v2620 = vpop.f32.mrf.mxu0
    %v2621 = vpop.f32.mrf.mxu0
    %2622 = vdwg.mxu0
    %v2623 = vmax.f32 %v2618, 0.0
    %v2624 = vpack.c.bf16 %v2623, %v2623
    %v2625 = vld [vmem:[%s3 + $0x74] sm:$0xf]
    %v2626 = vld [vmem:[%s3 + $0x78] sm:$0xf]
    %v2627 = vld [vmem:[%s3 + $0x7c] sm:$0xf]
    %v2628 = vld [vmem:[%s3 + $0x80] sm:$0xf]
    %v2629 = vld [vmem:[%s4 + $0x6] ss:$0 sm:$0xff]
    %v2634 = vunpack.c.l.b16 %v2625
    %v2635 = vunpack.c.l.b16 %v2626
    %v2636 = vunpack.c.l.b16 %v2627
    %v2637 = vunpack.c.l.b16 %v2628
    %v2638 = vpack.c.b16 %v2635, %v2634
    %v2639 = vpack.c.b16 %v2637, %v2636
    %v2643 = vsel %vm2579, %v2624, 0
    %2645 = vmatprep.subr.bf16.mxu0 0
    %2646 = vmatpush1.bf16.msra.mxu0 0
    %2647 = vmatprep.subr.bf16.mxu0 0
    %2648 = vmatpush1.bf16.msra.mxu0 0
    %2649 = vmatprep.subr.bf16.mxu0 0
    %2650 = vmatpush1.bf16.msra.mxu0 0
    %2651 = vmatprep.subr.bf16.mxu0 0
    %2652 = vmatpush1.bf16.msra.mxu0 0
    %2653 = vmatprep.subr.bf16.mxu0 0
    %2654 = vmatpush1.bf16.msra.mxu0 0
    %2655 = vmatprep.subr.bf16.mxu0 0
    %2656 = vmatpush1.bf16.msra.mxu0 0
    %2657 = vmatprep.subr.bf16.mxu0 0
    %2658 = vmatpush1.bf16.msra.mxu0 %v2639
    %2659 = vmatprep.subr.bf16.mxu0 0
    %2660 = vmatpush1.bf16.msra.mxu0 %v2638
    %2661 = vmatprep.subr.bf16.mxu0 0
    %2662 = vmatpush2.bf16.msra.mxu0 0
    %2663 = vmatprep.subr.bf16.mxu0 0
    %2664 = vmatpush2.bf16.msra.mxu0 0
    %2665 = vmatprep.subr.bf16.mxu0 0
    %2666 = vmatpush2.bf16.msra.mxu0 0
    %2667 = vmatprep.subr.bf16.mxu0 0
    %2668 = vmatpush2.bf16.msra.mxu0 0
    %2669 = vmatprep.subr.bf16.mxu0 0
    %2670 = vmatpush2.bf16.msra.mxu0 0
    %2671 = vmatprep.subr.bf16.mxu0 0
    %2672 = vmatpush2.bf16.msra.mxu0 0
    %2673 = vmatprep.subr.bf16.mxu0 0
    %2674 = vmatpush2.bf16.msra.mxu0 0
    %2675 = vmatprep.subr.bf16.mxu0 0
    %2676 = vmatpush2.bf16.msra.mxu0 0
    %2677 = vmatprep.mubr.bf16.mxu0 0
    %2678 = vmatmul.mubr.bf16.gmra.mxu0 %v2643
    %v2679 = vpop.f32.mrf.mxu0
    %v2680 = vadd.f32 %v2629, %v2679
    %v2681 = vpop.f32.mrf.mxu0
    %v2682 = vpop.f32.mrf.mxu0
    %v2683 = vpop.f32.mrf.mxu0
    %2684 = vdwg.mxu0
    %v2685 = vmax.f32 %v2680, 0.0
    %v2686 = vpack.c.bf16 %v2685, %v2685
    %v2687 = vld [vmem:[%s3 + $0x84] sm:$0xf]
    %v2688 = vld [vmem:[%s3 + $0x88] sm:$0xf]
    %v2689 = vld [vmem:[%s3 + $0x8c] sm:$0xf]
    %v2690 = vld [vmem:[%s3 + $0x90] sm:$0xf]
    %v2691 = vld [vmem:[%s4 + $0x7] ss:$0 sm:$0xff]
    %v2696 = vunpack.c.l.b16 %v2687
    %v2697 = vunpack.c.l.b16 %v2688
    %v2698 = vunpack.c.l.b16 %v2689
    %v2699 = vunpack.c.l.b16 %v2690
    %v2700 = vpack.c.b16 %v2697, %v2696
    %v2701 = vpack.c.b16 %v2699, %v2698
    %v2705 = vsel %vm2579, %v2686, 0
    %2707 = vmatprep.subr.bf16.mxu0 0
    %2708 = vmatpush1.bf16.msra.mxu0 0
    %2709 = vmatprep.subr.bf16.mxu0 0
    %2710 = vmatpush1.bf16.msra.mxu0 0
    %2711 = vmatprep.subr.bf16.mxu0 0
    %2712 = vmatpush1.bf16.msra.mxu0 0
    %2713 = vmatprep.subr.bf16.mxu0 0
    %2714 = vmatpush1.bf16.msra.mxu0 0
    %2715 = vmatprep.subr.bf16.mxu0 0
    %2716 = vmatpush1.bf16.msra.mxu0 0
    %2717 = vmatprep.subr.bf16.mxu0 0
    %2718 = vmatpush1.bf16.msra.mxu0 0
    %2719 = vmatprep.subr.bf16.mxu0 0
    %2720 = vmatpush1.bf16.msra.mxu0 %v2701
    %2721 = vmatprep.subr.bf16.mxu0 0
    %2722 = vmatpush1.bf16.msra.mxu0 %v2700
    %2723 = vmatprep.subr.bf16.mxu0 0
    %2724 = vmatpush2.bf16.msra.mxu0 0
    %2725 = vmatprep.subr.bf16.mxu0 0
    %2726 = vmatpush2.bf16.msra.mxu0 0
    %2727 = vmatprep.subr.bf16.mxu0 0
    %2728 = vmatpush2.bf16.msra.mxu0 0
    %2729 = vmatprep.subr.bf16.mxu0 0
    %2730 = vmatpush2.bf16.msra.mxu0 0
    %2731 = vmatprep.subr.bf16.mxu0 0
    %2732 = vmatpush2.bf16.msra.mxu0 0
    %2733 = vmatprep.subr.bf16.mxu0 0
    %2734 = vmatpush2.bf16.msra.mxu0 0
    %2735 = vmatprep.subr.bf16.mxu0 0
    %2736 = vmatpush2.bf16.msra.mxu0 0
    %2737 = vmatprep.subr.bf16.mxu0 0
    %2738 = vmatpush2.bf16.msra.mxu0 0
    %2739 = vmatprep.mubr.bf16.mxu0 0
    %2740 = vmatmul.mubr.bf16.gmra.mxu0 %v2705
    %v2741 = vpop.f32.mrf.mxu0
    %v2742 = vadd.f32 %v2691, %v2741
    %v2743 = vpop.f32.mrf.mxu0
    %v2744 = vpop.f32.mrf.mxu0
    %v2745 = vpop.f32.mrf.mxu0
    %2746 = vdwg.mxu0
    %vm2747 = vcmask 91136
    %2748 = vst.msk [vmem:[%s5] sm:$0x3] %vm2747, %v2742
    // Predicated region
    $region22: #{sac_model_forward.1} parent=1 // pred_check
      _
    $region23: #{sac_model_forward.1} parent=1 // pred_check_branch
      %2750 = sbr.rel (0) target = $region25
    $region24: #{sac_model_forward.1} parent=1 // pred_region
      _
    $region25: #{sac_model_forward.1} parent=1 // pred_fallthru
      _
    // Predicated region
    $region26: #{sac_model_forward.1} parent=1 // pred_check
      _
    $region27: #{sac_model_forward.1} parent=1 // pred_check_branch
      %2752 = sbr.rel (0) target = $region29
    $region28: #{sac_model_forward.1} parent=1 // pred_region
      %s2754 = ssub.s32 32, 32
      %2755 = vsyncadd [#allocation3], %s2754
      %s2757 = sshll.u32 [#allocation2], 4
      %s2758 = int_to_ptr.vmem [resolvable:$true] %s2757
      %2760 = dma.vmem_to_hbm [thread:$0]  %s2758, 32, %s6, [#allocation3]
    $region29: #{sac_model_forward.1} parent=1 // pred_fallthru
      _
    // Predicated region
    $region30: #{sac_model_forward.1} parent=1 // pred_check
      _
    $region31: #{sac_model_forward.1} parent=1 // pred_check_branch
      %2762 = sbr.rel (0) target = $region33
    $region32: #{sac_model_forward.1} parent=1 // pred_region
      _
    $region33: #{sac_model_forward.1} parent=1 // pred_fallthru
      _
    // Predicated region
    $region34: #{sac_model_forward.1} parent=1 // pred_check
      _
    $region35: #{sac_model_forward.1} parent=1 // pred_check_branch
      %2764 = sbr.rel (0) target = $region37
    $region36: #{sac_model_forward.1} parent=1 // pred_region
      _
    $region37: #{sac_model_forward.1} parent=1 // pred_fallthru
      _
    // Predicated region
    $region38: #{sac_model_forward.1} parent=1 // pred_check
      _
    $region39: #{sac_model_forward.1} parent=1 // pred_check_branch
      %2766 = sbr.rel (0) target = $region41
    $region40: #{sac_model_forward.1} parent=1 // pred_region
      %2767 = dma.done [#allocation3], 32
    $region41: #{sac_model_forward.1} parent=1 // pred_fallthru
      _
    // Predicated region
    $region42: #{sac_model_forward.1} parent=1 // pred_check
      _
    $region43: #{sac_model_forward.1} parent=1 // pred_check_branch
      %2769 = sbr.rel (0) target = $region45
    $region44: #{sac_model_forward.1} parent=1 // pred_region
      _
    $region45: #{sac_model_forward.1} parent=1 // pred_fallthru
      _
    %2770 = vsyncpa [#allocation3], 1

</llo_original>
